<compile_context>
chip_gen: v5e
topology: v5e:2x2
jax: 0.10.0
libtpu: 0.0.40
codegen_flags: <defaults>
</compile_context>

<pallas_src>
import math
from fractions import Fraction

import numpy as np
import jax
import jax.numpy as jnp
from jax.experimental import pallas as pl
from jax.experimental.pallas import tpu as pltpu


def _round_up(x, m):
    return ((x + m - 1) // m) * m


_VMEM_BUDGET = 40 * 1024 * 1024      # target working-set for tile selection
_VMEM_LIMIT_CAP = 56 * 1024 * 1024   # stays under v7x's 64 MiB physical VMEM


# ---------------------------------------------------------------------------
# Real-basis Clebsch-Gordan coefficients (constant buffers, = SO3.clebsch_gordan)
# ---------------------------------------------------------------------------
def _su2_cg_coeff(idx1, idx2, idx3):
    j1, m1 = idx1
    j2, m2 = idx2
    j3, m3 = idx3
    if m3 != m1 + m2:
        return 0.0
    vmin = int(max(-j1 + j2 + m3, -j1 + m1, 0))
    vmax = int(min(j2 + j3 + m1, j3 - j1 + j2, j3 + m3))

    def f(n):
        return math.factorial(round(n))

    C = ((2.0 * j3 + 1.0) * Fraction(
        f(j3 + j1 - j2) * f(j3 - j1 + j2) * f(j1 + j2 - j3) * f(j3 + m3) * f(j3 - m3),
        f(j1 + j2 + j3 + 1) * f(j1 - m1) * f(j1 + m1) * f(j2 - m2) * f(j2 + m2))) ** 0.5
    S = 0
    for v in range(vmin, vmax + 1):
        S += (-1) ** int(v + j2 + m2) * Fraction(
            f(j2 + j3 + m1 - v) * f(j1 - m1 + v),
            f(v) * f(j3 - j1 + j2 - v) * f(j3 + m3 - v) * f(v + j1 - j2 - m3))
    return float(C * S)


def _su2_clebsch_gordan(j1, j2, j3):
    mat = np.zeros((2 * j1 + 1, 2 * j2 + 1, 2 * j3 + 1), dtype=np.float64)
    if abs(j1 - j2) <= j3 <= j1 + j2:
        for m1 in range(-j1, j1 + 1):
            for m2 in range(-j2, j2 + 1):
                if abs(m1 + m2) <= j3:
                    mat[j1 + m1, j2 + m2, j3 + m1 + m2] = _su2_cg_coeff(
                        (j1, m1), (j2, m2), (j3, m1 + m2))
    return mat


def _change_basis_real_to_complex(l):
    q = np.zeros((2 * l + 1, 2 * l + 1), dtype=np.complex128)
    for m in range(-l, 0):
        q[l + m, l + abs(m)] = 1 / 2 ** 0.5
        q[l + m, l - abs(m)] = -1j / 2 ** 0.5
    q[l, l] = 1.0
    for m in range(1, l + 1):
        q[l + m, l + abs(m)] = (-1) ** m / 2 ** 0.5
        q[l + m, l - abs(m)] = 1j * (-1) ** m / 2 ** 0.5
    return (-1j) ** l * q  # phase makes the real-basis CG real


def clebsch_gordan(l_out, l_in, l_f):
    """Real-basis CG tensor of shape (2*l_out+1, 2*l_in+1, 2*l_f+1)."""
    Q1 = _change_basis_real_to_complex(l_out)
    Q2 = _change_basis_real_to_complex(l_in)
    Q3 = _change_basis_real_to_complex(l_f)
    C = _su2_clebsch_gordan(l_out, l_in, l_f).astype(np.complex128)
    C = np.einsum('ij,kl,mn,ikn->jlm', Q1, Q2, np.conj(Q3.T), C)
    return np.real(C).astype(np.float32)


# ---------------------------------------------------------------------------
# Real spherical harmonics (= SO3.spherical_harmonics_xyz for l <= 2)
# ---------------------------------------------------------------------------
def spherical_harmonics_xyz(ls, r):
    """r: [B, 3] -> Y: [sum(2l+1), B], per-l ordering m = -l..l (l=1 -> (y, z, x))."""
    x, y, z = r[:, 0], r[:, 1], r[:, 2]
    rn = jnp.sqrt(x * x + y * y + z * z)
    # NOTE: zero-norm points produce NaN, same as the original torch module.
    xh, yh, zh = x / rn, y / rn, z / rn
    rows = []
    for l in ls:
        if l == 0:
            rows.append(jnp.full_like(rn, 0.5 * math.sqrt(1.0 / math.pi))[None, :])
        elif l == 1:
            c = math.sqrt(3.0 / (4.0 * math.pi))
            rows.append(jnp.stack([c * yh, c * zh, c * xh], axis=0))
        elif l == 2:
            c1 = 0.5 * math.sqrt(15.0 / math.pi)
            c2 = 0.25 * math.sqrt(5.0 / math.pi)
            c3 = 0.25 * math.sqrt(15.0 / math.pi)
            rows.append(jnp.stack([c1 * xh * yh, c1 * yh * zh, c2 * (3.0 * zh * zh - 1.0),
                                   c1 * xh * zh, c3 * (xh * xh - yh * yh)], axis=0))
        else:
            raise NotImplementedError("sh implemented for l <= 2 only")
    return jnp.concatenate(rows, axis=0)


# ---------------------------------------------------------------------------
# Pallas kernel body: radial MLP (E, b1, b2 pre-folded) + fused CG contraction
# ---------------------------------------------------------------------------
def _se3_kernel_body(ry_ref, w1_ref, w2_ref, s_ref, basis_ref, o_ref):
    ry = ry_ref[...]                                              # [tb, yd2] = [Y^T | radii | 1]
    # Radial MLP: b1 enters via the constant-1 lane of ry; the extra hidden unit H is
    # identically 1 after relu so that the last row of W2a carries b2 (E pre-folded).
    # This dot is tiny (K = yd2, N = H+1); keep it at HIGHEST so the radii/MLP path stays
    # effectively exact -- its MXU cost is negligible.
    h = jnp.maximum(
        jnp.dot(ry, w1_ref[...], preferred_element_type=jnp.float32,
                precision=jax.lax.Precision.HIGHEST), 0.0)                     # [tb, H+1]
    # Coefficients / spherical-harmonic broadcasts onto the per-(path, m) axis:
    # single-pass bf16 MXU with f32 accumulation.  Extra precision here would be thrown
    # away anyway because ce*ye is rounded to bf16 for the dominant contraction.
    ce = jnp.dot(h.astype(jnp.bfloat16), w2_ref[...],
                 preferred_element_type=jnp.float32)                           # [tb, Qp]
    ye = jnp.dot(ry.astype(jnp.bfloat16), s_ref[...],
                 preferred_element_type=jnp.float32)                           # [tb, Qp]
    g = (ce * ye).astype(jnp.bfloat16)                                         # [tb, Qp]
    # Dominant contraction: single-pass bf16 MXU matmul, f32 accumulation.
    o_ref[...] = jnp.dot(g, basis_ref[...],
                         preferred_element_type=jnp.float32).astype(o_ref.dtype)


# ---------------------------------------------------------------------------
# The module
# ---------------------------------------------------------------------------
class Kernel:
    def __init__(self, Rs_in, Rs_out, radial_hidden=32, get_l_filters=None,
                 normalization='norm', key=None):
        assert normalization in ('norm', 'component')
        self.Rs_in = [(int(m), int(l), int(p)) for m, l, p in Rs_in]
        self.Rs_out = [(int(m), int(l), int(p)) for m, l, p in Rs_out]
        self.n_in = sum(m * (2 * l + 1) for m, l, p in self.Rs_in)
        self.n_out = sum(m * (2 * l + 1) for m, l, p in self.Rs_out)
        self.normalization = normalization
        self.H = radial_hidden

        if get_l_filters is None:
            get_l_filters = lambda l_in, l_out: list(range(abs(l_in - l_out), l_in + l_out + 1))

        def filters(l_in, p_in, l_out, p_out):
            return [l for l in get_l_filters(l_in, l_out)
                    if p_out == 0 or p_in * (-1) ** l == p_out]

        self.get_l_filters = filters
        self._check_input_output()

        n_path = 0
        sof = set()
        self.cg = {}
        for mul_out, l_out, p_out in self.Rs_out:
            for mul_in, l_in, p_in in self.Rs_in:
                lf = self.get_l_filters(l_in, p_in, l_out, p_out)
                assert lf == sorted(set(lf))
                n_path += mul_out * mul_in * len(lf)
                sof |= set(lf)
                for l in lf:
                    if (l_out, l_in, l) not in self.cg:
                        self.cg[(l_out, l_in, l)] = clebsch_gordan(l_out, l_in, l)
        self.n_path = n_path
        self.set_of_l_filters = sorted(sof)
        self.y_dim = sum(2 * l + 1 for l in self.set_of_l_filters)

        # RadialModel parameters (deterministic init)
        key = jax.random.PRNGKey(0) if key is None else key
        k1, k2, k3, k4 = jax.random.split(key, 4)
        H = radial_hidden
        self.W1 = jax.random.normal(k1, (1, H), jnp.float32)
        self.b1 = 0.1 * jax.random.normal(k2, (1, H), jnp.float32)
        self.W2 = jax.random.normal(k3, (H, n_path), jnp.float32) / math.sqrt(H)
        self.b2 = 0.1 * jax.random.normal(k4, (1, n_path), jnp.float32)

        self._build_constants()

    # -- structural checks (mirror torch check_input_output) -------------------
    def _check_input_output(self):
        for _, l_out, p_out in self.Rs_out:
            if not any(self.get_l_filters(l_in, p_in, l_out, p_out)
                       for _, l_in, p_in in self.Rs_in):
                raise ValueError(f'output (l={l_out}, p={p_out}) cannot be generated')
        for _, l_in, p_in in self.Rs_in:
            if not any(self.get_l_filters(l_in, p_in, l_out, p_out)
                       for _, l_out, p_out in self.Rs_out):
                raise ValueError(f'input (l={l_in}, p={p_in}) cannot be used')

    # -- constant matrices for the fused contraction ---------------------------
    def _build_constants(self):
        Q = 0
        for mul_out, l_out, p_out in self.Rs_out:
            for mul_in, l_in, p_in in self.Rs_in:
                lf = self.get_l_filters(l_in, p_in, l_out, p_out)
                Q += mul_out * mul_in * sum(2 * l + 1 for l in lf)

        E = np.zeros((self.n_path, Q), np.float32)              # coefficient selection
        S = np.zeros((self.y_dim, Q), np.float32)               # spherical-harmonic selection
        B = np.zeros((Q, self.n_out, self.n_in), np.float32)    # CG x normalization basis

        q = 0
        begin_c = 0
        begin_out = 0
        for mul_out, l_out, p_out in self.Rs_out:
            dim_out = 2 * l_out + 1
            num_summed = sum(mul_in * len(self.get_l_filters(l_in, p_in, l_out, p_out))
                             for mul_in, l_in, p_in in self.Rs_in)
            begin_in = 0
            for mul_in, l_in, p_in in self.Rs_in:
                dim_in = 2 * l_in + 1
                lf = self.get_l_filters(l_in, p_in, l_out, p_out)
                if lf:
                    n = mul_out * mul_in * len(lf)
                    if self.normalization == 'norm':
                        x = math.sqrt(2 * l_in + 1) * math.sqrt(4 * math.pi)
                    else:
                        x = math.sqrt(2 * l_out + 1) * math.sqrt(4 * math.pi)
                    x /= num_summed ** 0.5
                    for u in range(mul_out):
                        for v in range(mul_in):
                            for k, l in enumerate(lf):
                                C = self.cg[(l_out, l_in, l)]
                                p_idx = begin_c + u * mul_in * len(lf) + v * len(lf) + k
                                y_off = sum(2 * lp + 1 for lp in self.set_of_l_filters if lp < l)
                                for m in range(2 * l + 1):
                                    E[p_idx, q] = 1.0
                                    S[y_off + m, q] = 1.0
                                    B[q,
                                      begin_out + u * dim_out: begin_out + (u + 1) * dim_out,
                                      begin_in + v * dim_in: begin_in + (v + 1) * dim_in] = x * C[:, :, m]
                                    q += 1
                    begin_c += n
                begin_in += mul_in * dim_in
            begin_out += mul_out * dim_out
        assert q == Q and begin_c == self.n_path

        self.Q = Q
        nn = self.n_out * self.n_in
        # Pad the per-(path,m) axis Q (contraction dim of g @ Bf, lane dim of ce/ye) and the
        # flat output dim nn to multiples of 128: lane-dense unmasked output stores and clean
        # MXU tiling for arbitrary Rs configurations.
        Qp = _round_up(Q, 128)
        nnp = _round_up(nn, 128)
        self.Qp, self.nnp = Qp, nnp

        H = self.H
        H1 = H + 1                              # extra hidden unit = constant 1 after relu
        yd2 = self.y_dim + 2                    # [Y^T | radii | 1] slab width
        self.H1, self.yd2 = H1, yd2

        # Fold the 0/1 selection matrix E into the radial-MLP output layer:
        #   (h @ W2 + b2) @ E == h @ (W2 @ E) + (b2 @ E)
        W2E = np.asarray(self.W2) @ E           # [H, Q]
        b2E = np.asarray(self.b2) @ E           # [1, Q]

        # Lift W1/b1: ry @ W1a == radii * W1 + b1 (radii / constant-1 sit in the last two
        # lanes of ry), and column H is the "always 1" unit carrying b2E via W2a's last row.
        W1a = np.zeros((yd2, H1), np.float32)
        W1a[self.y_dim, :H] = np.asarray(self.W1)[0]        # radii lane
        W1a[self.y_dim + 1, :H] = np.asarray(self.b1)[0]    # ones lane -> bias b1
        W1a[self.y_dim + 1, H] = 1.0                        # extra unit: relu(1) == 1

        W2a = np.zeros((H1, Qp), np.float32)
        W2a[:H, :Q] = W2E
        W2a[H, :Q] = b2E[0]                                 # bias b2 (E-folded)

        Se = np.zeros((yd2, Qp), np.float32)                # Y selection; radii/ones rows zero
        Se[:self.y_dim, :Q] = S

        Bp = np.zeros((Qp, nnp), np.float32)
        Bp[:Q, :nn] = B.reshape(Q, nn)

        self.W1a = jnp.asarray(W1a)                         # f32 (tiny HIGHEST dot)
        # bf16 constants: single MXU pass per dot and half the VMEM residency.
        self.W2a = jnp.asarray(W2a, dtype=jnp.bfloat16)
        self.Se = jnp.asarray(Se, dtype=jnp.bfloat16)
        self.Bf = jnp.asarray(Bp, dtype=jnp.bfloat16)

    # -- VMEM working-set estimate for tile selection ---------------------------
    def _vmem_estimate(self, tb, out_bytes, single_buffer_consts):
        yd2, H1, Qp, nnp = self.yd2, self.H1, self.Qp, self.nnp
        per_row = (yd2 * 4 * 2 + nnp * out_bytes * 2        # double-buffered in/out blocks
                   + H1 * (4 + 2) + yd2 * 2                 # h (f32 + bf16 cast), ry bf16
                   + Qp * (4 + 4 + 2))                      # ce, ye (f32), g (bf16)
        const = yd2 * H1 * 4 + (H1 * Qp + yd2 * Qp + Qp * nnp) * 2
        return tb * per_row + const * (1 if single_buffer_consts else 2)

    # -- forward via Pallas -----------------------------------------------------
    def __call__(self, r, tile_b=4096, out_dtype=jnp.bfloat16):
        """Forward pass.  out_dtype defaults to bf16 (kernel is output-writeback bound on
        v5e/v6e); pass jnp.float32 for an exact-dtype match with the torch module at the
        cost of ~2x output HBM traffic."""
        size = r.shape[:-1]
        assert r.shape[-1] == 3
        r_flat = r.reshape(-1, 3).astype(jnp.float32)
        batch = r_flat.shape[0]

        # Wrapper-side geometry: spherical harmonics + radii + constant-1 lane packed into one
        # lane-contiguous slab [B, y_dim+2]: a single input DMA, no in-kernel cross-lane reduce,
        # and both biases folded into the matmuls.
        yt = spherical_harmonics_xyz(self.set_of_l_filters, r_flat).T        # [B, y_dim]
        radii = jnp.sqrt(jnp.sum(r_flat * r_flat, axis=-1, keepdims=True))   # [B, 1]
        ones = jnp.ones((batch, 1), jnp.float32)
        ry = jnp.concatenate([yt, radii, ones], axis=-1)                     # [B, y_dim+2]

        nn = self.n_out * self.n_in
        Qp, nnp, yd2, H1 = self.Qp, self.nnp, self.yd2, self.H1
        out_bytes = jnp.dtype(out_dtype).itemsize

        # Single-buffer the constant operands only when they are large (v7x 64 MiB VMEM);
        # they are never re-fetched (constant index_map) so this costs nothing.
        const_bytes = yd2 * H1 * 4 + (H1 * Qp + yd2 * Qp + Qp * nnp) * 2
        single_buffer_consts = const_bytes > 4 * 1024 * 1024
        const_kw = dict(pipeline_mode=pl.Buffered(1)) if single_buffer_consts else {}

        # Batch tile: as large as the VMEM budget allows (amortizes the ~0.35us/grid-step
        # overhead), multiple of 16 so both f32 and bf16 blocks satisfy sublane tiling.
        tb = max(16, min(_round_up(tile_b, 16), _round_up(batch, 16)))
        while tb > 16 and self._vmem_estimate(tb, out_bytes, single_buffer_consts) > _VMEM_BUDGET:
            tb = max(16, _round_up(tb // 2, 16))

        # v7x two-TensorCore split: >=2 grid steps whenever there is enough work, then balance
        # the tiles so the last one is never nearly empty (no wasted MXU/writeback on padding).
        ntiles = max(-(-batch // tb), 2 if batch >= 512 else 1)
        tb = _round_up(-(-batch // ntiles), 16)
        bpad = ntiles * tb
        if bpad != batch:
            ry = jnp.concatenate(
                [ry, jnp.zeros((bpad - batch, yd2), jnp.float32)], axis=0)

        vmem_limit = int(min(
            _VMEM_LIMIT_CAP,
            max(32 * 1024 * 1024,
                self._vmem_estimate(tb, out_bytes, single_buffer_consts) * 3 // 2)))

        out = pl.pallas_call(
            _se3_kernel_body,
            out_shape=jax.ShapeDtypeStruct((bpad, nnp), out_dtype),
            grid_spec=pltpu.PrefetchScalarGridSpec(
                num_scalar_prefetch=0,
                grid=(ntiles,),
                in_specs=[
                    pl.BlockSpec((tb, yd2), lambda i: (i, 0)),            # [Y^T | radii | 1]
                    pl.BlockSpec((yd2, H1), lambda i: (0, 0)),            # lifted W1 (+b1, unit)
                    pl.BlockSpec((H1, Qp), lambda i: (0, 0), **const_kw),  # W2@E (+b2@E), bf16
                    pl.BlockSpec((yd2, Qp), lambda i: (0, 0), **const_kw),  # Y selection, bf16
                    pl.BlockSpec((Qp, nnp), lambda i: (0, 0), **const_kw),  # CG x norm basis, bf16
                ],
                out_specs=pl.BlockSpec((tb, nnp), lambda i: (i, 0)),
            ),
            compiler_params=pltpu.CompilerParams(
                dimension_semantics=("parallel",),
                vmem_limit_bytes=vmem_limit),
        )(ry, self.W1a, self.W2a, self.Se, self.Bf)

        # Skip the post-kernel slice when it is a no-op (avoids an extra HBM pass over the
        # output of a writeback-bound kernel).
        if bpad != batch:
            out = out[:batch]
        if nnp != nn:
            out = out[:, :nn]
        return out.reshape(*size, self.n_out, self.n_in)

    # -- pure-JAX reference mirroring the torch loops (for validation) ----------
    def reference(self, r):
        hp = jax.lax.Precision.HIGHEST
        size = r.shape[:-1]
        r_flat = r.reshape(-1, 3).astype(jnp.float32)
        batch = r_flat.shape[0]
        kernel = jnp.zeros((batch, self.n_out, self.n_in), jnp.float32)
        Ys = spherical_harmonics_xyz(self.set_of_l_filters, r_flat)      # [y_dim, B]
        radii = jnp.sqrt(jnp.sum(r_flat * r_flat, axis=1))               # [B]
        h = jnp.maximum(radii[:, None] * self.W1 + self.b1, 0.0)
        coefficients = jnp.dot(h, self.W2, precision=hp) + self.b2       # [B, n_path]

        begin_c = 0
        begin_out = 0
        for mul_out, l_out, p_out in self.Rs_out:
            s_out = slice(begin_out, begin_out + mul_out * (2 * l_out + 1))
            begin_out += mul_out * (2 * l_out + 1)
            num_summed = sum(mul_in * len(self.get_l_filters(l_in, p_in, l_out, p_out))
                             for mul_in, l_in, p_in in self.Rs_in)
            begin_in = 0
            for mul_in, l_in, p_in in self.Rs_in:
                s_in = slice(begin_in, begin_in + mul_in * (2 * l_in + 1))
                begin_in += mul_in * (2 * l_in + 1)
                lf = self.get_l_filters(l_in, p_in, l_out, p_out)
                if not lf:
                    continue
                n = mul_out * mul_in * len(lf)
                c = coefficients[:, begin_c:begin_c + n].reshape(batch, mul_out, mul_in, len(lf))
                begin_c += n
                K = 0
                for k, l in enumerate(lf):
                    tmp = sum(2 * lp + 1 for lp in self.set_of_l_filters if lp < l)
                    Y = Ys[tmp:tmp + 2 * l + 1]
                    C = jnp.asarray(self.cg[(l_out, l_in, l)])
                    K = K + jnp.einsum('ijk,kz,zuv->zuivj', C, Y, c[..., k], precision=hp)
                if self.normalization == 'norm':
                    x = math.sqrt(2 * l_in + 1) * math.sqrt(4 * math.pi)
                else:
                    x = math.sqrt(2 * l_out + 1) * math.sqrt(4 * math.pi)
                x /= num_summed ** 0.5
                K = K * x
                kernel = kernel.at[:, s_out, s_in].set(
                    K.reshape(batch, mul_out * (2 * l_out + 1), mul_in * (2 * l_in + 1)))
        return kernel.reshape(*size, self.n_out, self.n_in)


if __name__ == "__main__":
    # Rs: (multiplicity, l, parity);  parity 0 = no parity constraint
    Rs_in = [(4, 0, 0), (4, 1, 0)]
    Rs_out = [(4, 0, 0), (4, 1, 0)]

    key = jax.random.PRNGKey(0)
    k_param, k_input = jax.random.split(key)
    mod = Kernel(Rs_in, Rs_out, radial_hidden=32, key=k_param)

    r = jax.random.normal(k_input, (2, 128, 3), jnp.float32)   # [..., 3], 256 points

    out = jax.block_until_ready(mod(r))          # default: bf16 output (perf default)
    ref = jax.block_until_ready(mod.reference(r))

    assert out.shape == (2, 128, mod.n_out, mod.n_in)
    err = float(jnp.max(jnp.abs(out.astype(jnp.float32) - ref)))
    scale = float(jnp.max(jnp.abs(ref))) + 1e-6
    # Tolerance accounts for the single-pass bf16 ce/ye dots, the bf16 g @ Bf contraction and
    # the bf16 output store (the radial-MLP input path stays f32/HIGHEST).
    assert err <= 2e-2 * scale + 1e-3, f"Pallas/reference mismatch: err={err}, scale={scale}"
    print("KERNEL_OK")
</pallas_src>

<mosaic_0001>
module attributes {stable_mosaic.version = 11 : i64} {
  func.func @_se3_kernel_body(%arg0: i32, %arg1: memref<256x11xf32, #tpu.memory_space<vmem>>, %arg2: memref<11x33xf32, #tpu.memory_space<vmem>>, %arg3: memref<33x256xbf16, #tpu.memory_space<vmem>>, %arg4: memref<11x256xbf16, #tpu.memory_space<vmem>>, %arg5: memref<256x256xbf16, #tpu.memory_space<vmem>>, %arg6: memref<256x256xbf16, #tpu.memory_space<vmem>>) attributes {dimension_semantics = [#tpu.dimension_semantics<parallel>], iteration_bounds = array<i64: 1>, scalar_prefetch = 0 : i64, scratch_operands = 0 : i64, tpu.core_type = #tpu.core_type<tc>, window_params = [{transform_indices = @transform_0, window_bounds = array<i64: 256, 11>}, {pipeline_mode = #tpu.pipeline_mode<synchronous>, transform_indices = @transform_1, window_bounds = array<i64: 11, 33>}, {pipeline_mode = #tpu.pipeline_mode<synchronous>, transform_indices = @transform_2, window_bounds = array<i64: 33, 256>}, {pipeline_mode = #tpu.pipeline_mode<synchronous>, transform_indices = @transform_3, window_bounds = array<i64: 11, 256>}, {pipeline_mode = #tpu.pipeline_mode<synchronous>, transform_indices = @transform_4, window_bounds = array<i64: 256, 256>}, {transform_indices = @transform_5, window_bounds = array<i64: 256, 256>}]} {
    %c0 = arith.constant 0 : index
    %c0_0 = arith.constant 0 : index
    %0 = vector.load %arg1[%c0, %c0_0] : memref<256x11xf32, #tpu.memory_space<vmem>>, vector<256x11xf32>
    %c0_1 = arith.constant 0 : index
    %c0_2 = arith.constant 0 : index
    %1 = vector.load %arg2[%c0_1, %c0_2] : memref<11x33xf32, #tpu.memory_space<vmem>>, vector<11x33xf32>
    %cst = arith.constant dense<0.000000e+00> : vector<256x33xf32>
    %2 = tpu.matmul %0, %1, %cst {dimension_numbers = #tpu.dot_dimension_numbers<[1], [0], [0], [1], [0, 0, 1, 1], [], []>, precision = #tpu.contract_precision<fp32>} : vector<256x11xf32>, vector<11x33xf32>, vector<256x33xf32> -> vector<256x33xf32>
    %cst_3 = arith.constant 0.000000e+00 : f32
    %3 = vector.broadcast %cst_3 : f32 to vector<256x33xf32>
    %4 = arith.maximumf %2, %3 : vector<256x33xf32>
    %5 = arith.truncf %4 : vector<256x33xf32> to vector<256x33xbf16>
    %c0_4 = arith.constant 0 : index
    %c0_5 = arith.constant 0 : index
    %6 = vector.load %arg3[%c0_4, %c0_5] : memref<33x256xbf16, #tpu.memory_space<vmem>>, vector<33x256xbf16>
    %cst_6 = arith.constant dense<0.000000e+00> : vector<256x256xf32>
    %7 = tpu.matmul %5, %6, %cst_6 {dimension_numbers = #tpu.dot_dimension_numbers<[1], [0], [0], [1], [0, 0, 1, 1], [], []>} : vector<256x33xbf16>, vector<33x256xbf16>, vector<256x256xf32> -> vector<256x256xf32>
    %8 = arith.truncf %0 : vector<256x11xf32> to vector<256x11xbf16>
    %c0_7 = arith.constant 0 : index
    %c0_8 = arith.constant 0 : index
    %9 = vector.load %arg4[%c0_7, %c0_8] : memref<11x256xbf16, #tpu.memory_space<vmem>>, vector<11x256xbf16>
    %cst_9 = arith.constant dense<0.000000e+00> : vector<256x256xf32>
    %10 = tpu.matmul %8, %9, %cst_9 {dimension_numbers = #tpu.dot_dimension_numbers<[1], [0], [0], [1], [0, 0, 1, 1], [], []>} : vector<256x11xbf16>, vector<11x256xbf16>, vector<256x256xf32> -> vector<256x256xf32>
    %11 = arith.mulf %7, %10 : vector<256x256xf32>
    %12 = arith.truncf %11 : vector<256x256xf32> to vector<256x256xbf16>
    %c0_10 = arith.constant 0 : index
    %c0_11 = arith.constant 0 : index
    %13 = vector.load %arg5[%c0_10, %c0_11] : memref<256x256xbf16, #tpu.memory_space<vmem>>, vector<256x256xbf16>
    %cst_12 = arith.constant dense<0.000000e+00> : vector<256x256xf32>
    %14 = tpu.matmul %12, %13, %cst_12 {dimension_numbers = #tpu.dot_dimension_numbers<[1], [0], [0], [1], [0, 0, 1, 1], [], []>} : vector<256x256xbf16>, vector<256x256xbf16>, vector<256x256xf32> -> vector<256x256xf32>
    %15 = arith.truncf %14 : vector<256x256xf32> to vector<256x256xbf16>
    %c0_13 = arith.constant 0 : index
    %c0_14 = arith.constant 0 : index
    %16 = vector.load %arg6[%c0_13, %c0_14] : memref<256x256xbf16, #tpu.memory_space<vmem>>, vector<256x256xbf16>
    tpu.vector_store %arg6[%c0_13, %c0_14], %15 {strides = array<i32>} : memref<256x256xbf16, #tpu.memory_space<vmem>>, vector<256x256xbf16>,
    return
  }
  func.func @transform_0(%arg0: i32) -> (i32, i32) {
    %c0_i32 = arith.constant 0 : i32
    %c0_i32_0 = arith.constant 0 : i32
    return %arg0, %c0_i32 : i32, i32
  }
  func.func @transform_1(%arg0: i32) -> (i32, i32) {
    %c0_i32 = arith.constant 0 : i32
    %c0_i32_0 = arith.constant 0 : i32
    %c0_i32_1 = arith.constant 0 : i32
    return %c0_i32, %c0_i32_0 : i32, i32
  }
  func.func @transform_2(%arg0: i32) -> (i32, i32) {
    %c0_i32 = arith.constant 0 : i32
    %c0_i32_0 = arith.constant 0 : i32
    %c0_i32_1 = arith.constant 0 : i32
    return %c0_i32, %c0_i32_0 : i32, i32
  }
  func.func @transform_3(%arg0: i32) -> (i32, i32) {
    %c0_i32 = arith.constant 0 : i32
    %c0_i32_0 = arith.constant 0 : i32
    %c0_i32_1 = arith.constant 0 : i32
    return %c0_i32, %c0_i32_0 : i32, i32
  }
  func.func @transform_4(%arg0: i32) -> (i32, i32) {
    %c0_i32 = arith.constant 0 : i32
    %c0_i32_0 = arith.constant 0 : i32
    %c0_i32_1 = arith.constant 0 : i32
    return %c0_i32, %c0_i32_0 : i32, i32
  }
  func.func @transform_5(%arg0: i32) -> (i32, i32) {
    %c0_i32 = arith.constant 0 : i32
    %c0_i32_0 = arith.constant 0 : i32
    return %arg0, %c0_i32 : i32, i32
  }
}

</mosaic_0001>

<llo_original>
// kernel: tpu_custom_call.1
$region0: #{tpu_custom_call.1}
  #allocation0 [shape = 'u32[]', space=smem, size = 0x4, offset = 0x4, fixed_abs, tag = 'smem constant byte address 0x4 - core index']
  #allocation1 [shape = 'u32[72,128]{1,0:T(1,128)}', space=vmem, size = 0x9000, scoped, tag = 'internal scratch']
  %s0 = inlined_call_operand.vmem [shape: f32[256,11], index: 0, kind: input, shape index: {}]
  %s1 = inlined_call_operand.vmem [shape: f32[11,33], index: 1, kind: input, shape index: {}]
  %s2 = inlined_call_operand.hbm [shape: bf16[33,256], index: 2, kind: input, shape index: {}]
  %s3 = inlined_call_operand.vmem [shape: bf16[11,256], index: 3, kind: input, shape index: {}]
  %s4 = inlined_call_operand.vmem [shape: bf16[256,256], index: 4, kind: input, shape index: {}]
  %s5 = inlined_call_operand.hbm [shape: bf16[256,256], index: 5, kind: output, shape index: {}]
  %s6 = sld [smem:[#allocation0]]
  $region34: #{tpu_custom_call.1} parent=0
    _
  %s8 = ssub.s32 1, %s6
  %s9 = scalar_select 0, %s8, %s6
  $region1: #{tpu_custom_call.1} parent=0
    #allocation2 [shape = 'u8[20480]{0}', space=vmem, size = 0x5000, scoped, tag = 'input window, operand 2, single buffered']
    #allocation3 [shape = 's32[1]{0}', space=sflag, size = 0x4, scoped, tag = 'scoped memory for tpu_custom_call.1']
    #allocation4 [shape = 's32[1]{0}', space=sflag, size = 0x4, scoped, tag = 'scoped memory for tpu_custom_call.1']
    #allocation5 [shape = 'u8[131072]{0}', space=vmem, size = 0x20000, scoped, tag = 'output window, operand 0, single buffered']
    %10 = vsyncpa [#allocation3], 0
    %11 = vsyncpa [#allocation4], 0
    // Predicated region
    $region2: #{tpu_custom_call.1} parent=1 // pred_check
      _
    $region3: #{tpu_custom_call.1} parent=1 // pred_check_branch
      %13 = sbr.rel (0) target = $region5
    $region4: #{tpu_custom_call.1} parent=1 // pred_region
      _
    $region5: #{tpu_custom_call.1} parent=1 // pred_fallthru
      _
    // Predicated region
    $region6: #{tpu_custom_call.1} parent=1 // pred_check
      _
    $region7: #{tpu_custom_call.1} parent=1 // pred_check_branch
      %15 = sbr.rel (0) target = $region9
    $region8: #{tpu_custom_call.1} parent=1 // pred_region
      _
    $region9: #{tpu_custom_call.1} parent=1 // pred_fallthru
      _
    // Predicated region
    $region10: #{tpu_custom_call.1} parent=1 // pred_check
      _
    $region11: #{tpu_custom_call.1} parent=1 // pred_check_branch
      %17 = sbr.rel (0) target = $region13
    $region12: #{tpu_custom_call.1} parent=1 // pred_region
      %19 = vsyncadd [#allocation3], 0
      %s20 = sshll.u32 %s2, 4
      %s21 = int_to_ptr.hbm [resolvable:$true] %s20
      %s22 = sshll.u32 [#allocation2], 4
      %s23 = int_to_ptr.vmem [resolvable:$true] %s22
      %28 = dma.hbm_to_vmem [thread:$0]  %s21, 640, %s23, [#allocation3], 128, 128, 8
    $region13: #{tpu_custom_call.1} parent=1 // pred_fallthru
      _
    // Predicated region
    $region14: #{tpu_custom_call.1} parent=1 // pred_check
      _
    $region15: #{tpu_custom_call.1} parent=1 // pred_check_branch
      %30 = sbr.rel (0) target = $region17
    $region16: #{tpu_custom_call.1} parent=1 // pred_region
      _
    $region17: #{tpu_custom_call.1} parent=1 // pred_fallthru
      _
    // Predicated region
    $region18: #{tpu_custom_call.1} parent=1 // pred_check
      _
    $region19: #{tpu_custom_call.1} parent=1 // pred_check_branch
      %32 = sbr.rel (0) target = $region21
    $region20: #{tpu_custom_call.1} parent=1 // pred_region
      _
    $region21: #{tpu_custom_call.1} parent=1 // pred_fallthru
      _
    // Predicated region
    $region22: #{tpu_custom_call.1} parent=1 // pred_check
      _
    $region23: #{tpu_custom_call.1} parent=1 // pred_check_branch
      %34 = sbr.rel (0) target = $region25
    $region24: #{tpu_custom_call.1} parent=1 // pred_region
      %36 = dma.done [#allocation3], 640
    $region25: #{tpu_custom_call.1} parent=1 // pred_fallthru
      _
    %v38 = vld [vmem:[%s0] sm:$0xff]
    %v39 = vld [vmem:[%s0 + $0x8] sm:$0xff]
    %v40 = vld [vmem:[%s0 + $0x10] sm:$0xff]
    %v41 = vld [vmem:[%s0 + $0x18] sm:$0xff]
    %v42 = vld [vmem:[%s0 + $0x20] sm:$0xff]
    %v43 = vld [vmem:[%s0 + $0x28] sm:$0xff]
    %v44 = vld [vmem:[%s0 + $0x30] sm:$0xff]
    %v45 = vld [vmem:[%s0 + $0x38] sm:$0xff]
    %v46 = vld [vmem:[%s0 + $0x40] sm:$0xff]
    %v47 = vld [vmem:[%s0 + $0x48] sm:$0xff]
    %v48 = vld [vmem:[%s0 + $0x50] sm:$0xff]
    %v49 = vld [vmem:[%s0 + $0x58] sm:$0xff]
    %v50 = vld [vmem:[%s0 + $0x60] sm:$0xff]
    %v51 = vld [vmem:[%s0 + $0x68] sm:$0xff]
    %v52 = vld [vmem:[%s0 + $0x70] sm:$0xff]
    %v53 = vld [vmem:[%s0 + $0x78] sm:$0xff]
    %v54 = vld [vmem:[%s0 + $0x80] sm:$0xff]
    %v55 = vld [vmem:[%s0 + $0x88] sm:$0xff]
    %v56 = vld [vmem:[%s0 + $0x90] sm:$0xff]
    %v57 = vld [vmem:[%s0 + $0x98] sm:$0xff]
    %v58 = vld [vmem:[%s0 + $0xa0] sm:$0xff]
    %v59 = vld [vmem:[%s0 + $0xa8] sm:$0xff]
    %v60 = vld [vmem:[%s0 + $0xb0] sm:$0xff]
    %v61 = vld [vmem:[%s0 + $0xb8] sm:$0xff]
    %v62 = vld [vmem:[%s0 + $0xc0] sm:$0xff]
    %v63 = vld [vmem:[%s0 + $0xc8] sm:$0xff]
    %v64 = vld [vmem:[%s0 + $0xd0] sm:$0xff]
    %v65 = vld [vmem:[%s0 + $0xd8] sm:$0xff]
    %v66 = vld [vmem:[%s0 + $0xe0] sm:$0xff]
    %v67 = vld [vmem:[%s0 + $0xe8] sm:$0xff]
    %v68 = vld [vmem:[%s0 + $0xf0] sm:$0xff]
    %v69 = vld [vmem:[%s0 + $0xf8] sm:$0xff]
    %v70 = vld [vmem:[%s1] sm:$0xff]
    %v71 = vld [vmem:[%s1 + $0x8] sm:$0x7]
    %vm72 = vcmask 89088
    %v74 = vsel %vm72, %v38, 0
    %v77 = vsel %vm72, %v39, 0
    %v80 = vsel %vm72, %v40, 0
    %v83 = vsel %vm72, %v41, 0
    %v86 = vsel %vm72, %v42, 0
    %v89 = vsel %vm72, %v43, 0
    %v92 = vsel %vm72, %v44, 0
    %v95 = vsel %vm72, %v45, 0
    %v98 = vsel %vm72, %v46, 0
    %v101 = vsel %vm72, %v47, 0
    %v104 = vsel %vm72, %v48, 0
    %v107 = vsel %vm72, %v49, 0
    %v110 = vsel %vm72, %v50, 0
    %v113 = vsel %vm72, %v51, 0
    %v116 = vsel %vm72, %v52, 0
    %v119 = vsel %vm72, %v53, 0
    %v122 = vsel %vm72, %v54, 0
    %v125 = vsel %vm72, %v55, 0
    %v128 = vsel %vm72, %v56, 0
    %v131 = vsel %vm72, %v57, 0
    %v134 = vsel %vm72, %v58, 0
    %v137 = vsel %vm72, %v59, 0
    %v140 = vsel %vm72, %v60, 0
    %v143 = vsel %vm72, %v61, 0
    %v146 = vsel %vm72, %v62, 0
    %v149 = vsel %vm72, %v63, 0
    %v152 = vsel %vm72, %v64, 0
    %v155 = vsel %vm72, %v65, 0
    %v158 = vsel %vm72, %v66, 0
    %v161 = vsel %vm72, %v67, 0
    %v164 = vsel %vm72, %v68, 0
    %v167 = vsel %vm72, %v69, 0
    %vm169 = vcmask 1042432
    %v171 = vsel %vm169, %v71, 0
    %173 = vmatpush.msra.mxu0 0.0
    %174 = vmatpush.msra.mxu0 0.0
    %175 = vmatpush.msra.mxu0 0.0
    %176 = vmatpush.msra.mxu0 0.0
    %177 = vmatpush.msra.mxu0 0.0
    %178 = vmatpush.msra.mxu0 0.0
    %179 = vmatpush.msra.mxu0 0.0
    %180 = vmatpush.msra.mxu0 0.0
    %181 = vmatpush.msra.mxu0 0.0
    %182 = vmatpush.msra.mxu0 0.0
    %183 = vmatpush.msra.mxu0 0.0
    %184 = vmatpush.msra.mxu0 0.0
    %185 = vmatpush.msra.mxu0 0.0
    %186 = vmatpush.msra.mxu0 0.0
    %v187 = vand.u32 %v171, 4294901760
    %188 = vmatpush.msra.mxu0 %v187
    %v189 = vand.u32 %v70, 4294901760
    %190 = vmatpush.msra.mxu0 %v189
    %v191 = vand.u32 %v74, 4294901760
    %v192 = vsub.f32 %v74, %v191
    %v193 = vand.u32 %v192, 4294901760
    %v194 = vsub.f32 %v192, %v193
    %v195 = vand.u32 %v194, 4294901760
    %196 = vmatmul.f32.gmra.mxu0 %v195
    %v197 = vpop.f32.mrf.mxu0
    %v198 = vadd.f32 0.0, %v197
    %v199 = vand.u32 %v77, 4294901760
    %v200 = vsub.f32 %v77, %v199
    %v201 = vand.u32 %v200, 4294901760
    %v202 = vsub.f32 %v200, %v201
    %v203 = vand.u32 %v202, 4294901760
    %204 = vmatmul.f32.gmra.mxu0 %v203
    %v205 = vpop.f32.mrf.mxu0
    %v206 = vadd.f32 0.0, %v205
    %v207 = vand.u32 %v80, 4294901760
    %v208 = vsub.f32 %v80, %v207
    %v209 = vand.u32 %v208, 4294901760
    %v210 = vsub.f32 %v208, %v209
    %v211 = vand.u32 %v210, 4294901760
    %212 = vmatmul.f32.gmra.mxu0 %v211
    %v213 = vpop.f32.mrf.mxu0
    %v214 = vadd.f32 0.0, %v213
    %v215 = vand.u32 %v83, 4294901760
    %v216 = vsub.f32 %v83, %v215
    %v217 = vand.u32 %v216, 4294901760
    %v218 = vsub.f32 %v216, %v217
    %v219 = vand.u32 %v218, 4294901760
    %220 = vmatmul.f32.gmra.mxu0 %v219
    %v221 = vpop.f32.mrf.mxu0
    %v222 = vadd.f32 0.0, %v221
    %v223 = vand.u32 %v86, 4294901760
    %v224 = vsub.f32 %v86, %v223
    %v225 = vand.u32 %v224, 4294901760
    %v226 = vsub.f32 %v224, %v225
    %v227 = vand.u32 %v226, 4294901760
    %228 = vmatmul.f32.gmra.mxu0 %v227
    %v229 = vpop.f32.mrf.mxu0
    %v230 = vadd.f32 0.0, %v229
    %v231 = vand.u32 %v89, 4294901760
    %v232 = vsub.f32 %v89, %v231
    %v233 = vand.u32 %v232, 4294901760
    %v234 = vsub.f32 %v232, %v233
    %v235 = vand.u32 %v234, 4294901760
    %236 = vmatmul.f32.gmra.mxu0 %v235
    %v237 = vpop.f32.mrf.mxu0
    %v238 = vadd.f32 0.0, %v237
    %v239 = vand.u32 %v92, 4294901760
    %v240 = vsub.f32 %v92, %v239
    %v241 = vand.u32 %v240, 4294901760
    %v242 = vsub.f32 %v240, %v241
    %v243 = vand.u32 %v242, 4294901760
    %244 = vmatmul.f32.gmra.mxu0 %v243
    %v245 = vpop.f32.mrf.mxu0
    %v246 = vadd.f32 0.0, %v245
    %v247 = vand.u32 %v95, 4294901760
    %v248 = vsub.f32 %v95, %v247
    %v249 = vand.u32 %v248, 4294901760
    %v250 = vsub.f32 %v248, %v249
    %v251 = vand.u32 %v250, 4294901760
    %252 = vmatmul.f32.gmra.mxu0 %v251
    %v253 = vpop.f32.mrf.mxu0
    %v254 = vadd.f32 0.0, %v253
    %v255 = vand.u32 %v98, 4294901760
    %v256 = vsub.f32 %v98, %v255
    %v257 = vand.u32 %v256, 4294901760
    %v258 = vsub.f32 %v256, %v257
    %v259 = vand.u32 %v258, 4294901760
    %260 = vmatmul.f32.gmra.mxu0 %v259
    %v261 = vpop.f32.mrf.mxu0
    %v262 = vadd.f32 0.0, %v261
    %v263 = vand.u32 %v101, 4294901760
    %v264 = vsub.f32 %v101, %v263
    %v265 = vand.u32 %v264, 4294901760
    %v266 = vsub.f32 %v264, %v265
    %v267 = vand.u32 %v266, 4294901760
    %268 = vmatmul.f32.gmra.mxu0 %v267
    %v269 = vpop.f32.mrf.mxu0
    %v270 = vadd.f32 0.0, %v269
    %v271 = vand.u32 %v104, 4294901760
    %v272 = vsub.f32 %v104, %v271
    %v273 = vand.u32 %v272, 4294901760
    %v274 = vsub.f32 %v272, %v273
    %v275 = vand.u32 %v274, 4294901760
    %276 = vmatmul.f32.gmra.mxu0 %v275
    %v277 = vpop.f32.mrf.mxu0
    %v278 = vadd.f32 0.0, %v277
    %v279 = vand.u32 %v107, 4294901760
    %v280 = vsub.f32 %v107, %v279
    %v281 = vand.u32 %v280, 4294901760
    %v282 = vsub.f32 %v280, %v281
    %v283 = vand.u32 %v282, 4294901760
    %284 = vmatmul.f32.gmra.mxu0 %v283
    %v285 = vpop.f32.mrf.mxu0
    %v286 = vadd.f32 0.0, %v285
    %v287 = vand.u32 %v110, 4294901760
    %v288 = vsub.f32 %v110, %v287
    %v289 = vand.u32 %v288, 4294901760
    %v290 = vsub.f32 %v288, %v289
    %v291 = vand.u32 %v290, 4294901760
    %292 = vmatmul.f32.gmra.mxu0 %v291
    %v293 = vpop.f32.mrf.mxu0
    %v294 = vadd.f32 0.0, %v293
    %v295 = vand.u32 %v113, 4294901760
    %v296 = vsub.f32 %v113, %v295
    %v297 = vand.u32 %v296, 4294901760
    %v298 = vsub.f32 %v296, %v297
    %v299 = vand.u32 %v298, 4294901760
    %300 = vmatmul.f32.gmra.mxu0 %v299
    %v301 = vpop.f32.mrf.mxu0
    %v302 = vadd.f32 0.0, %v301
    %v303 = vand.u32 %v116, 4294901760
    %v304 = vsub.f32 %v116, %v303
    %v305 = vand.u32 %v304, 4294901760
    %v306 = vsub.f32 %v304, %v305
    %v307 = vand.u32 %v306, 4294901760
    %308 = vmatmul.f32.gmra.mxu0 %v307
    %v309 = vpop.f32.mrf.mxu0
    %v310 = vadd.f32 0.0, %v309
    %v311 = vand.u32 %v119, 4294901760
    %v312 = vsub.f32 %v119, %v311
    %v313 = vand.u32 %v312, 4294901760
    %v314 = vsub.f32 %v312, %v313
    %v315 = vand.u32 %v314, 4294901760
    %316 = vmatmul.f32.gmra.mxu0 %v315
    %v317 = vpop.f32.mrf.mxu0
    %v318 = vadd.f32 0.0, %v317
    %v319 = vand.u32 %v122, 4294901760
    %v320 = vsub.f32 %v122, %v319
    %v321 = vand.u32 %v320, 4294901760
    %v322 = vsub.f32 %v320, %v321
    %v323 = vand.u32 %v322, 4294901760
    %324 = vmatmul.f32.gmra.mxu0 %v323
    %v325 = vpop.f32.mrf.mxu0
    %v326 = vadd.f32 0.0, %v325
    %v327 = vand.u32 %v125, 4294901760
    %v328 = vsub.f32 %v125, %v327
    %v329 = vand.u32 %v328, 4294901760
    %v330 = vsub.f32 %v328, %v329
    %v331 = vand.u32 %v330, 4294901760
    %332 = vmatmul.f32.gmra.mxu0 %v331
    %v333 = vpop.f32.mrf.mxu0
    %v334 = vadd.f32 0.0, %v333
    %v335 = vand.u32 %v128, 4294901760
    %v336 = vsub.f32 %v128, %v335
    %v337 = vand.u32 %v336, 4294901760
    %v338 = vsub.f32 %v336, %v337
    %v339 = vand.u32 %v338, 4294901760
    %340 = vmatmul.f32.gmra.mxu0 %v339
    %v341 = vpop.f32.mrf.mxu0
    %v342 = vadd.f32 0.0, %v341
    %v343 = vand.u32 %v131, 4294901760
    %v344 = vsub.f32 %v131, %v343
    %v345 = vand.u32 %v344, 4294901760
    %v346 = vsub.f32 %v344, %v345
    %v347 = vand.u32 %v346, 4294901760
    %348 = vmatmul.f32.gmra.mxu0 %v347
    %v349 = vpop.f32.mrf.mxu0
    %v350 = vadd.f32 0.0, %v349
    %v351 = vand.u32 %v134, 4294901760
    %v352 = vsub.f32 %v134, %v351
    %v353 = vand.u32 %v352, 4294901760
    %v354 = vsub.f32 %v352, %v353
    %v355 = vand.u32 %v354, 4294901760
    %356 = vmatmul.f32.gmra.mxu0 %v355
    %v357 = vpop.f32.mrf.mxu0
    %v358 = vadd.f32 0.0, %v357
    %v359 = vand.u32 %v137, 4294901760
    %v360 = vsub.f32 %v137, %v359
    %v361 = vand.u32 %v360, 4294901760
    %v362 = vsub.f32 %v360, %v361
    %v363 = vand.u32 %v362, 4294901760
    %364 = vmatmul.f32.gmra.mxu0 %v363
    %v365 = vpop.f32.mrf.mxu0
    %v366 = vadd.f32 0.0, %v365
    %v367 = vand.u32 %v140, 4294901760
    %v368 = vsub.f32 %v140, %v367
    %v369 = vand.u32 %v368, 4294901760
    %v370 = vsub.f32 %v368, %v369
    %v371 = vand.u32 %v370, 4294901760
    %372 = vmatmul.f32.gmra.mxu0 %v371
    %v373 = vpop.f32.mrf.mxu0
    %v374 = vadd.f32 0.0, %v373
    %v375 = vand.u32 %v143, 4294901760
    %v376 = vsub.f32 %v143, %v375
    %v377 = vand.u32 %v376, 4294901760
    %v378 = vsub.f32 %v376, %v377
    %v379 = vand.u32 %v378, 4294901760
    %380 = vmatmul.f32.gmra.mxu0 %v379
    %v381 = vpop.f32.mrf.mxu0
    %v382 = vadd.f32 0.0, %v381
    %v383 = vand.u32 %v146, 4294901760
    %v384 = vsub.f32 %v146, %v383
    %v385 = vand.u32 %v384, 4294901760
    %v386 = vsub.f32 %v384, %v385
    %v387 = vand.u32 %v386, 4294901760
    %388 = vmatmul.f32.gmra.mxu0 %v387
    %v389 = vpop.f32.mrf.mxu0
    %v390 = vadd.f32 0.0, %v389
    %v391 = vand.u32 %v149, 4294901760
    %v392 = vsub.f32 %v149, %v391
    %v393 = vand.u32 %v392, 4294901760
    %v394 = vsub.f32 %v392, %v393
    %v395 = vand.u32 %v394, 4294901760
    %396 = vmatmul.f32.gmra.mxu0 %v395
    %v397 = vpop.f32.mrf.mxu0
    %v398 = vadd.f32 0.0, %v397
    %v399 = vand.u32 %v152, 4294901760
    %v400 = vsub.f32 %v152, %v399
    %v401 = vand.u32 %v400, 4294901760
    %v402 = vsub.f32 %v400, %v401
    %v403 = vand.u32 %v402, 4294901760
    %404 = vmatmul.f32.gmra.mxu0 %v403
    %v405 = vpop.f32.mrf.mxu0
    %v406 = vadd.f32 0.0, %v405
    %v407 = vand.u32 %v155, 4294901760
    %v408 = vsub.f32 %v155, %v407
    %v409 = vand.u32 %v408, 4294901760
    %v410 = vsub.f32 %v408, %v409
    %v411 = vand.u32 %v410, 4294901760
    %412 = vmatmul.f32.gmra.mxu0 %v411
    %v413 = vpop.f32.mrf.mxu0
    %v414 = vadd.f32 0.0, %v413
    %v415 = vand.u32 %v158, 4294901760
    %v416 = vsub.f32 %v158, %v415
    %v417 = vand.u32 %v416, 4294901760
    %v418 = vsub.f32 %v416, %v417
    %v419 = vand.u32 %v418, 4294901760
    %420 = vmatmul.f32.gmra.mxu0 %v419
    %v421 = vpop.f32.mrf.mxu0
    %v422 = vadd.f32 0.0, %v421
    %v423 = vand.u32 %v161, 4294901760
    %v424 = vsub.f32 %v161, %v423
    %v425 = vand.u32 %v424, 4294901760
    %v426 = vsub.f32 %v424, %v425
    %v427 = vand.u32 %v426, 4294901760
    %428 = vmatmul.f32.gmra.mxu0 %v427
    %v429 = vpop.f32.mrf.mxu0
    %v430 = vadd.f32 0.0, %v429
    %v431 = vand.u32 %v164, 4294901760
    %v432 = vsub.f32 %v164, %v431
    %v433 = vand.u32 %v432, 4294901760
    %v434 = vsub.f32 %v432, %v433
    %v435 = vand.u32 %v434, 4294901760
    %436 = vmatmul.f32.gmra.mxu0 %v435
    %v437 = vpop.f32.mrf.mxu0
    %v438 = vadd.f32 0.0, %v437
    %v439 = vand.u32 %v167, 4294901760
    %v440 = vsub.f32 %v167, %v439
    %v441 = vand.u32 %v440, 4294901760
    %v442 = vsub.f32 %v440, %v441
    %v443 = vand.u32 %v442, 4294901760
    %444 = vmatmul.f32.gmra.mxu0 %v443
    %v445 = vpop.f32.mrf.mxu0
    %v446 = vadd.f32 0.0, %v445
    %447 = vdwg.mxu0
    %448 = vmatpush.msra.mxu0 0.0
    %449 = vmatpush.msra.mxu0 0.0
    %450 = vmatpush.msra.mxu0 0.0
    %451 = vmatpush.msra.mxu0 0.0
    %452 = vmatpush.msra.mxu0 0.0
    %453 = vmatpush.msra.mxu0 0.0
    %454 = vmatpush.msra.mxu0 0.0
    %455 = vmatpush.msra.mxu0 0.0
    %456 = vmatpush.msra.mxu0 0.0
    %457 = vmatpush.msra.mxu0 0.0
    %458 = vmatpush.msra.mxu0 0.0
    %459 = vmatpush.msra.mxu0 0.0
    %460 = vmatpush.msra.mxu0 0.0
    %461 = vmatpush.msra.mxu0 0.0
    %v462 = vand.u32 %v171, 4294901760
    %v463 = vsub.f32 %v171, %v462
    %v464 = vand.u32 %v463, 4294901760
    %v465 = vsub.f32 %v463, %v464
    %v466 = vand.u32 %v465, 4294901760
    %467 = vmatpush.msra.mxu0 %v466
    %v468 = vand.u32 %v70, 4294901760
    %v469 = vsub.f32 %v70, %v468
    %v470 = vand.u32 %v469, 4294901760
    %v471 = vsub.f32 %v469, %v470
    %v472 = vand.u32 %v471, 4294901760
    %473 = vmatpush.msra.mxu0 %v472
    %v474 = vand.u32 %v74, 4294901760
    %475 = vmatmul.f32.gmra.mxu0 %v474
    %v476 = vpop.f32.mrf.mxu0
    %v477 = vadd.f32 %v198, %v476
    %v478 = vand.u32 %v77, 4294901760
    %479 = vmatmul.f32.gmra.mxu0 %v478
    %v480 = vpop.f32.mrf.mxu0
    %v481 = vadd.f32 %v206, %v480
    %v482 = vand.u32 %v80, 4294901760
    %483 = vmatmul.f32.gmra.mxu0 %v482
    %v484 = vpop.f32.mrf.mxu0
    %v485 = vadd.f32 %v214, %v484
    %v486 = vand.u32 %v83, 4294901760
    %487 = vmatmul.f32.gmra.mxu0 %v486
    %v488 = vpop.f32.mrf.mxu0
    %v489 = vadd.f32 %v222, %v488
    %v490 = vand.u32 %v86, 4294901760
    %491 = vmatmul.f32.gmra.mxu0 %v490
    %v492 = vpop.f32.mrf.mxu0
    %v493 = vadd.f32 %v230, %v492
    %v494 = vand.u32 %v89, 4294901760
    %495 = vmatmul.f32.gmra.mxu0 %v494
    %v496 = vpop.f32.mrf.mxu0
    %v497 = vadd.f32 %v238, %v496
    %v498 = vand.u32 %v92, 4294901760
    %499 = vmatmul.f32.gmra.mxu0 %v498
    %v500 = vpop.f32.mrf.mxu0
    %v501 = vadd.f32 %v246, %v500
    %v502 = vand.u32 %v95, 4294901760
    %503 = vmatmul.f32.gmra.mxu0 %v502
    %v504 = vpop.f32.mrf.mxu0
    %v505 = vadd.f32 %v254, %v504
    %v506 = vand.u32 %v98, 4294901760
    %507 = vmatmul.f32.gmra.mxu0 %v506
    %v508 = vpop.f32.mrf.mxu0
    %v509 = vadd.f32 %v262, %v508
    %v510 = vand.u32 %v101, 4294901760
    %511 = vmatmul.f32.gmra.mxu0 %v510
    %v512 = vpop.f32.mrf.mxu0
    %v513 = vadd.f32 %v270, %v512
    %v514 = vand.u32 %v104, 4294901760
    %515 = vmatmul.f32.gmra.mxu0 %v514
    %v516 = vpop.f32.mrf.mxu0
    %v517 = vadd.f32 %v278, %v516
    %v518 = vand.u32 %v107, 4294901760
    %519 = vmatmul.f32.gmra.mxu0 %v518
    %v520 = vpop.f32.mrf.mxu0
    %v521 = vadd.f32 %v286, %v520
    %v522 = vand.u32 %v110, 4294901760
    %523 = vmatmul.f32.gmra.mxu0 %v522
    %v524 = vpop.f32.mrf.mxu0
    %v525 = vadd.f32 %v294, %v524
    %v526 = vand.u32 %v113, 4294901760
    %527 = vmatmul.f32.gmra.mxu0 %v526
    %v528 = vpop.f32.mrf.mxu0
    %v529 = vadd.f32 %v302, %v528
    %v530 = vand.u32 %v116, 4294901760
    %531 = vmatmul.f32.gmra.mxu0 %v530
    %v532 = vpop.f32.mrf.mxu0
    %v533 = vadd.f32 %v310, %v532
    %v534 = vand.u32 %v119, 4294901760
    %535 = vmatmul.f32.gmra.mxu0 %v534
    %v536 = vpop.f32.mrf.mxu0
    %v537 = vadd.f32 %v318, %v536
    %v538 = vand.u32 %v122, 4294901760
    %539 = vmatmul.f32.gmra.mxu0 %v538
    %v540 = vpop.f32.mrf.mxu0
    %v541 = vadd.f32 %v326, %v540
    %v542 = vand.u32 %v125, 4294901760
    %543 = vmatmul.f32.gmra.mxu0 %v542
    %v544 = vpop.f32.mrf.mxu0
    %v545 = vadd.f32 %v334, %v544
    %v546 = vand.u32 %v128, 4294901760
    %547 = vmatmul.f32.gmra.mxu0 %v546
    %v548 = vpop.f32.mrf.mxu0
    %v549 = vadd.f32 %v342, %v548
    %v550 = vand.u32 %v131, 4294901760
    %551 = vmatmul.f32.gmra.mxu0 %v550
    %v552 = vpop.f32.mrf.mxu0
    %v553 = vadd.f32 %v350, %v552
    %v554 = vand.u32 %v134, 4294901760
    %555 = vmatmul.f32.gmra.mxu0 %v554
    %v556 = vpop.f32.mrf.mxu0
    %v557 = vadd.f32 %v358, %v556
    %v558 = vand.u32 %v137, 4294901760
    %559 = vmatmul.f32.gmra.mxu0 %v558
    %v560 = vpop.f32.mrf.mxu0
    %v561 = vadd.f32 %v366, %v560
    %v562 = vand.u32 %v140, 4294901760
    %563 = vmatmul.f32.gmra.mxu0 %v562
    %v564 = vpop.f32.mrf.mxu0
    %v565 = vadd.f32 %v374, %v564
    %v566 = vand.u32 %v143, 4294901760
    %567 = vmatmul.f32.gmra.mxu0 %v566
    %v568 = vpop.f32.mrf.mxu0
    %v569 = vadd.f32 %v382, %v568
    %v570 = vand.u32 %v146, 4294901760
    %571 = vmatmul.f32.gmra.mxu0 %v570
    %v572 = vpop.f32.mrf.mxu0
    %v573 = vadd.f32 %v390, %v572
    %v574 = vand.u32 %v149, 4294901760
    %575 = vmatmul.f32.gmra.mxu0 %v574
    %v576 = vpop.f32.mrf.mxu0
    %v577 = vadd.f32 %v398, %v576
    %v578 = vand.u32 %v152, 4294901760
    %579 = vmatmul.f32.gmra.mxu0 %v578
    %v580 = vpop.f32.mrf.mxu0
    %v581 = vadd.f32 %v406, %v580
    %v582 = vand.u32 %v155, 4294901760
    %583 = vmatmul.f32.gmra.mxu0 %v582
    %v584 = vpop.f32.mrf.mxu0
    %v585 = vadd.f32 %v414, %v584
    %v586 = vand.u32 %v158, 4294901760
    %587 = vmatmul.f32.gmra.mxu0 %v586
    %v588 = vpop.f32.mrf.mxu0
    %v589 = vadd.f32 %v422, %v588
    %v590 = vand.u32 %v161, 4294901760
    %591 = vmatmul.f32.gmra.mxu0 %v590
    %v592 = vpop.f32.mrf.mxu0
    %v593 = vadd.f32 %v430, %v592
    %v594 = vand.u32 %v164, 4294901760
    %595 = vmatmul.f32.gmra.mxu0 %v594
    %v596 = vpop.f32.mrf.mxu0
    %v597 = vadd.f32 %v438, %v596
    %v598 = vand.u32 %v167, 4294901760
    %599 = vmatmul.f32.gmra.mxu0 %v598
    %v600 = vpop.f32.mrf.mxu0
    %v601 = vadd.f32 %v446, %v600
    %602 = vdwg.mxu0
    %603 = vmatpush.msra.mxu0 0.0
    %604 = vmatpush.msra.mxu0 0.0
    %605 = vmatpush.msra.mxu0 0.0
    %606 = vmatpush.msra.mxu0 0.0
    %607 = vmatpush.msra.mxu0 0.0
    %608 = vmatpush.msra.mxu0 0.0
    %609 = vmatpush.msra.mxu0 0.0
    %610 = vmatpush.msra.mxu0 0.0
    %611 = vmatpush.msra.mxu0 0.0
    %612 = vmatpush.msra.mxu0 0.0
    %613 = vmatpush.msra.mxu0 0.0
    %614 = vmatpush.msra.mxu0 0.0
    %615 = vmatpush.msra.mxu0 0.0
    %616 = vmatpush.msra.mxu0 0.0
    %v617 = vand.u32 %v171, 4294901760
    %v618 = vsub.f32 %v171, %v617
    %619 = vmatpush.msra.mxu0 %v618
    %v620 = vand.u32 %v70, 4294901760
    %v621 = vsub.f32 %v70, %v620
    %622 = vmatpush.msra.mxu0 %v621
    %v623 = vand.u32 %v74, 4294901760
    %v624 = vsub.f32 %v74, %v623
    %625 = vmatmul.f32.gmra.mxu0 %v624
    %v626 = vpop.f32.mrf.mxu0
    %v627 = vadd.f32 %v477, %v626
    %v628 = vand.u32 %v77, 4294901760
    %v629 = vsub.f32 %v77, %v628
    %630 = vmatmul.f32.gmra.mxu0 %v629
    %v631 = vpop.f32.mrf.mxu0
    %v632 = vadd.f32 %v481, %v631
    %v633 = vand.u32 %v80, 4294901760
    %v634 = vsub.f32 %v80, %v633
    %635 = vmatmul.f32.gmra.mxu0 %v634
    %v636 = vpop.f32.mrf.mxu0
    %v637 = vadd.f32 %v485, %v636
    %v638 = vand.u32 %v83, 4294901760
    %v639 = vsub.f32 %v83, %v638
    %640 = vmatmul.f32.gmra.mxu0 %v639
    %v641 = vpop.f32.mrf.mxu0
    %v642 = vadd.f32 %v489, %v641
    %v643 = vand.u32 %v86, 4294901760
    %v644 = vsub.f32 %v86, %v643
    %645 = vmatmul.f32.gmra.mxu0 %v644
    %v646 = vpop.f32.mrf.mxu0
    %v647 = vadd.f32 %v493, %v646
    %v648 = vand.u32 %v89, 4294901760
    %v649 = vsub.f32 %v89, %v648
    %650 = vmatmul.f32.gmra.mxu0 %v649
    %v651 = vpop.f32.mrf.mxu0
    %v652 = vadd.f32 %v497, %v651
    %v653 = vand.u32 %v92, 4294901760
    %v654 = vsub.f32 %v92, %v653
    %655 = vmatmul.f32.gmra.mxu0 %v654
    %v656 = vpop.f32.mrf.mxu0
    %v657 = vadd.f32 %v501, %v656
    %v658 = vand.u32 %v95, 4294901760
    %v659 = vsub.f32 %v95, %v658
    %660 = vmatmul.f32.gmra.mxu0 %v659
    %v661 = vpop.f32.mrf.mxu0
    %v662 = vadd.f32 %v505, %v661
    %v663 = vand.u32 %v98, 4294901760
    %v664 = vsub.f32 %v98, %v663
    %665 = vmatmul.f32.gmra.mxu0 %v664
    %v666 = vpop.f32.mrf.mxu0
    %v667 = vadd.f32 %v509, %v666
    %v668 = vand.u32 %v101, 4294901760
    %v669 = vsub.f32 %v101, %v668
    %670 = vmatmul.f32.gmra.mxu0 %v669
    %v671 = vpop.f32.mrf.mxu0
    %v672 = vadd.f32 %v513, %v671
    %v673 = vand.u32 %v104, 4294901760
    %v674 = vsub.f32 %v104, %v673
    %675 = vmatmul.f32.gmra.mxu0 %v674
    %v676 = vpop.f32.mrf.mxu0
    %v677 = vadd.f32 %v517, %v676
    %v678 = vand.u32 %v107, 4294901760
    %v679 = vsub.f32 %v107, %v678
    %680 = vmatmul.f32.gmra.mxu0 %v679
    %v681 = vpop.f32.mrf.mxu0
    %v682 = vadd.f32 %v521, %v681
    %v683 = vand.u32 %v110, 4294901760
    %v684 = vsub.f32 %v110, %v683
    %685 = vmatmul.f32.gmra.mxu0 %v684
    %v686 = vpop.f32.mrf.mxu0
    %v687 = vadd.f32 %v525, %v686
    %v688 = vand.u32 %v113, 4294901760
    %v689 = vsub.f32 %v113, %v688
    %690 = vmatmul.f32.gmra.mxu0 %v689
    %v691 = vpop.f32.mrf.mxu0
    %v692 = vadd.f32 %v529, %v691
    %v693 = vand.u32 %v116, 4294901760
    %v694 = vsub.f32 %v116, %v693
    %695 = vmatmul.f32.gmra.mxu0 %v694
    %v696 = vpop.f32.mrf.mxu0
    %v697 = vadd.f32 %v533, %v696
    %v698 = vand.u32 %v119, 4294901760
    %v699 = vsub.f32 %v119, %v698
    %700 = vmatmul.f32.gmra.mxu0 %v699
    %v701 = vpop.f32.mrf.mxu0
    %v702 = vadd.f32 %v537, %v701
    %v703 = vand.u32 %v122, 4294901760
    %v704 = vsub.f32 %v122, %v703
    %705 = vmatmul.f32.gmra.mxu0 %v704
    %v706 = vpop.f32.mrf.mxu0
    %v707 = vadd.f32 %v541, %v706
    %v708 = vand.u32 %v125, 4294901760
    %v709 = vsub.f32 %v125, %v708
    %710 = vmatmul.f32.gmra.mxu0 %v709
    %v711 = vpop.f32.mrf.mxu0
    %v712 = vadd.f32 %v545, %v711
    %v713 = vand.u32 %v128, 4294901760
    %v714 = vsub.f32 %v128, %v713
    %715 = vmatmul.f32.gmra.mxu0 %v714
    %v716 = vpop.f32.mrf.mxu0
    %v717 = vadd.f32 %v549, %v716
    %v718 = vand.u32 %v131, 4294901760
    %v719 = vsub.f32 %v131, %v718
    %720 = vmatmul.f32.gmra.mxu0 %v719
    %v721 = vpop.f32.mrf.mxu0
    %v722 = vadd.f32 %v553, %v721
    %v723 = vand.u32 %v134, 4294901760
    %v724 = vsub.f32 %v134, %v723
    %725 = vmatmul.f32.gmra.mxu0 %v724
    %v726 = vpop.f32.mrf.mxu0
    %v727 = vadd.f32 %v557, %v726
    %v728 = vand.u32 %v137, 4294901760
    %v729 = vsub.f32 %v137, %v728
    %730 = vmatmul.f32.gmra.mxu0 %v729
    %v731 = vpop.f32.mrf.mxu0
    %v732 = vadd.f32 %v561, %v731
    %v733 = vand.u32 %v140, 4294901760
    %v734 = vsub.f32 %v140, %v733
    %735 = vmatmul.f32.gmra.mxu0 %v734
    %v736 = vpop.f32.mrf.mxu0
    %v737 = vadd.f32 %v565, %v736
    %v738 = vand.u32 %v143, 4294901760
    %v739 = vsub.f32 %v143, %v738
    %740 = vmatmul.f32.gmra.mxu0 %v739
    %v741 = vpop.f32.mrf.mxu0
    %v742 = vadd.f32 %v569, %v741
    %v743 = vand.u32 %v146, 4294901760
    %v744 = vsub.f32 %v146, %v743
    %745 = vmatmul.f32.gmra.mxu0 %v744
    %v746 = vpop.f32.mrf.mxu0
    %v747 = vadd.f32 %v573, %v746
    %v748 = vand.u32 %v149, 4294901760
    %v749 = vsub.f32 %v149, %v748
    %750 = vmatmul.f32.gmra.mxu0 %v749
    %v751 = vpop.f32.mrf.mxu0
    %v752 = vadd.f32 %v577, %v751
    %v753 = vand.u32 %v152, 4294901760
    %v754 = vsub.f32 %v152, %v753
    %755 = vmatmul.f32.gmra.mxu0 %v754
    %v756 = vpop.f32.mrf.mxu0
    %v757 = vadd.f32 %v581, %v756
    %v758 = vand.u32 %v155, 4294901760
    %v759 = vsub.f32 %v155, %v758
    %760 = vmatmul.f32.gmra.mxu0 %v759
    %v761 = vpop.f32.mrf.mxu0
    %v762 = vadd.f32 %v585, %v761
    %v763 = vand.u32 %v158, 4294901760
    %v764 = vsub.f32 %v158, %v763
    %765 = vmatmul.f32.gmra.mxu0 %v764
    %v766 = vpop.f32.mrf.mxu0
    %v767 = vadd.f32 %v589, %v766
    %v768 = vand.u32 %v161, 4294901760
    %v769 = vsub.f32 %v161, %v768
    %770 = vmatmul.f32.gmra.mxu0 %v769
    %v771 = vpop.f32.mrf.mxu0
    %v772 = vadd.f32 %v593, %v771
    %v773 = vand.u32 %v164, 4294901760
    %v774 = vsub.f32 %v164, %v773
    %775 = vmatmul.f32.gmra.mxu0 %v774
    %v776 = vpop.f32.mrf.mxu0
    %v777 = vadd.f32 %v597, %v776
    %v778 = vand.u32 %v167, 4294901760
    %v779 = vsub.f32 %v167, %v778
    %780 = vmatmul.f32.gmra.mxu0 %v779
    %v781 = vpop.f32.mrf.mxu0
    %v782 = vadd.f32 %v601, %v781
    %783 = vdwg.mxu0
    %784 = vmatpush.msra.mxu0 0.0
    %785 = vmatpush.msra.mxu0 0.0
    %786 = vmatpush.msra.mxu0 0.0
    %787 = vmatpush.msra.mxu0 0.0
    %788 = vmatpush.msra.mxu0 0.0
    %789 = vmatpush.msra.mxu0 0.0
    %790 = vmatpush.msra.mxu0 0.0
    %791 = vmatpush.msra.mxu0 0.0
    %792 = vmatpush.msra.mxu0 0.0
    %793 = vmatpush.msra.mxu0 0.0
    %794 = vmatpush.msra.mxu0 0.0
    %795 = vmatpush.msra.mxu0 0.0
    %796 = vmatpush.msra.mxu0 0.0
    %797 = vmatpush.msra.mxu0 0.0
    %v798 = vand.u32 %v171, 4294901760
    %799 = vmatpush.msra.mxu0 %v798
    %v800 = vand.u32 %v70, 4294901760
    %801 = vmatpush.msra.mxu0 %v800
    %v802 = vand.u32 %v74, 4294901760
    %v803 = vsub.f32 %v74, %v802
    %v804 = vand.u32 %v803, 4294901760
    %805 = vmatmul.f32.gmra.mxu0 %v804
    %v806 = vpop.f32.mrf.mxu0
    %v807 = vadd.f32 %v627, %v806
    %v808 = vand.u32 %v77, 4294901760
    %v809 = vsub.f32 %v77, %v808
    %v810 = vand.u32 %v809, 4294901760
    %811 = vmatmul.f32.gmra.mxu0 %v810
    %v812 = vpop.f32.mrf.mxu0
    %v813 = vadd.f32 %v632, %v812
    %v814 = vand.u32 %v80, 4294901760
    %v815 = vsub.f32 %v80, %v814
    %v816 = vand.u32 %v815, 4294901760
    %817 = vmatmul.f32.gmra.mxu0 %v816
    %v818 = vpop.f32.mrf.mxu0
    %v819 = vadd.f32 %v637, %v818
    %v820 = vand.u32 %v83, 4294901760
    %v821 = vsub.f32 %v83, %v820
    %v822 = vand.u32 %v821, 4294901760
    %823 = vmatmul.f32.gmra.mxu0 %v822
    %v824 = vpop.f32.mrf.mxu0
    %v825 = vadd.f32 %v642, %v824
    %v826 = vand.u32 %v86, 4294901760
    %v827 = vsub.f32 %v86, %v826
    %v828 = vand.u32 %v827, 4294901760
    %829 = vmatmul.f32.gmra.mxu0 %v828
    %v830 = vpop.f32.mrf.mxu0
    %v831 = vadd.f32 %v647, %v830
    %v832 = vand.u32 %v89, 4294901760
    %v833 = vsub.f32 %v89, %v832
    %v834 = vand.u32 %v833, 4294901760
    %835 = vmatmul.f32.gmra.mxu0 %v834
    %v836 = vpop.f32.mrf.mxu0
    %v837 = vadd.f32 %v652, %v836
    %v838 = vand.u32 %v92, 4294901760
    %v839 = vsub.f32 %v92, %v838
    %v840 = vand.u32 %v839, 4294901760
    %841 = vmatmul.f32.gmra.mxu0 %v840
    %v842 = vpop.f32.mrf.mxu0
    %v843 = vadd.f32 %v657, %v842
    %v844 = vand.u32 %v95, 4294901760
    %v845 = vsub.f32 %v95, %v844
    %v846 = vand.u32 %v845, 4294901760
    %847 = vmatmul.f32.gmra.mxu0 %v846
    %v848 = vpop.f32.mrf.mxu0
    %v849 = vadd.f32 %v662, %v848
    %v850 = vand.u32 %v98, 4294901760
    %v851 = vsub.f32 %v98, %v850
    %v852 = vand.u32 %v851, 4294901760
    %853 = vmatmul.f32.gmra.mxu0 %v852
    %v854 = vpop.f32.mrf.mxu0
    %v855 = vadd.f32 %v667, %v854
    %v856 = vand.u32 %v101, 4294901760
    %v857 = vsub.f32 %v101, %v856
    %v858 = vand.u32 %v857, 4294901760
    %859 = vmatmul.f32.gmra.mxu0 %v858
    %v860 = vpop.f32.mrf.mxu0
    %v861 = vadd.f32 %v672, %v860
    %v862 = vand.u32 %v104, 4294901760
    %v863 = vsub.f32 %v104, %v862
    %v864 = vand.u32 %v863, 4294901760
    %865 = vmatmul.f32.gmra.mxu0 %v864
    %v866 = vpop.f32.mrf.mxu0
    %v867 = vadd.f32 %v677, %v866
    %v868 = vand.u32 %v107, 4294901760
    %v869 = vsub.f32 %v107, %v868
    %v870 = vand.u32 %v869, 4294901760
    %871 = vmatmul.f32.gmra.mxu0 %v870
    %v872 = vpop.f32.mrf.mxu0
    %v873 = vadd.f32 %v682, %v872
    %v874 = vand.u32 %v110, 4294901760
    %v875 = vsub.f32 %v110, %v874
    %v876 = vand.u32 %v875, 4294901760
    %877 = vmatmul.f32.gmra.mxu0 %v876
    %v878 = vpop.f32.mrf.mxu0
    %v879 = vadd.f32 %v687, %v878
    %v880 = vand.u32 %v113, 4294901760
    %v881 = vsub.f32 %v113, %v880
    %v882 = vand.u32 %v881, 4294901760
    %883 = vmatmul.f32.gmra.mxu0 %v882
    %v884 = vpop.f32.mrf.mxu0
    %v885 = vadd.f32 %v692, %v884
    %v886 = vand.u32 %v116, 4294901760
    %v887 = vsub.f32 %v116, %v886
    %v888 = vand.u32 %v887, 4294901760
    %889 = vmatmul.f32.gmra.mxu0 %v888
    %v890 = vpop.f32.mrf.mxu0
    %v891 = vadd.f32 %v697, %v890
    %v892 = vand.u32 %v119, 4294901760
    %v893 = vsub.f32 %v119, %v892
    %v894 = vand.u32 %v893, 4294901760
    %895 = vmatmul.f32.gmra.mxu0 %v894
    %v896 = vpop.f32.mrf.mxu0
    %v897 = vadd.f32 %v702, %v896
    %v898 = vand.u32 %v122, 4294901760
    %v899 = vsub.f32 %v122, %v898
    %v900 = vand.u32 %v899, 4294901760
    %901 = vmatmul.f32.gmra.mxu0 %v900
    %v902 = vpop.f32.mrf.mxu0
    %v903 = vadd.f32 %v707, %v902
    %v904 = vand.u32 %v125, 4294901760
    %v905 = vsub.f32 %v125, %v904
    %v906 = vand.u32 %v905, 4294901760
    %907 = vmatmul.f32.gmra.mxu0 %v906
    %v908 = vpop.f32.mrf.mxu0
    %v909 = vadd.f32 %v712, %v908
    %v910 = vand.u32 %v128, 4294901760
    %v911 = vsub.f32 %v128, %v910
    %v912 = vand.u32 %v911, 4294901760
    %913 = vmatmul.f32.gmra.mxu0 %v912
    %v914 = vpop.f32.mrf.mxu0
    %v915 = vadd.f32 %v717, %v914
    %v916 = vand.u32 %v131, 4294901760
    %v917 = vsub.f32 %v131, %v916
    %v918 = vand.u32 %v917, 4294901760
    %919 = vmatmul.f32.gmra.mxu0 %v918
    %v920 = vpop.f32.mrf.mxu0
    %v921 = vadd.f32 %v722, %v920
    %v922 = vand.u32 %v134, 4294901760
    %v923 = vsub.f32 %v134, %v922
    %v924 = vand.u32 %v923, 4294901760
    %925 = vmatmul.f32.gmra.mxu0 %v924
    %v926 = vpop.f32.mrf.mxu0
    %v927 = vadd.f32 %v727, %v926
    %v928 = vand.u32 %v137, 4294901760
    %v929 = vsub.f32 %v137, %v928
    %v930 = vand.u32 %v929, 4294901760
    %931 = vmatmul.f32.gmra.mxu0 %v930
    %v932 = vpop.f32.mrf.mxu0
    %v933 = vadd.f32 %v732, %v932
    %v934 = vand.u32 %v140, 4294901760
    %v935 = vsub.f32 %v140, %v934
    %v936 = vand.u32 %v935, 4294901760
    %937 = vmatmul.f32.gmra.mxu0 %v936
    %v938 = vpop.f32.mrf.mxu0
    %v939 = vadd.f32 %v737, %v938
    %v940 = vand.u32 %v143, 4294901760
    %v941 = vsub.f32 %v143, %v940
    %v942 = vand.u32 %v941, 4294901760
    %943 = vmatmul.f32.gmra.mxu0 %v942
    %v944 = vpop.f32.mrf.mxu0
    %v945 = vadd.f32 %v742, %v944
    %v946 = vand.u32 %v146, 4294901760
    %v947 = vsub.f32 %v146, %v946
    %v948 = vand.u32 %v947, 4294901760
    %949 = vmatmul.f32.gmra.mxu0 %v948
    %v950 = vpop.f32.mrf.mxu0
    %v951 = vadd.f32 %v747, %v950
    %v952 = vand.u32 %v149, 4294901760
    %v953 = vsub.f32 %v149, %v952
    %v954 = vand.u32 %v953, 4294901760
    %955 = vmatmul.f32.gmra.mxu0 %v954
    %v956 = vpop.f32.mrf.mxu0
    %v957 = vadd.f32 %v752, %v956
    %v958 = vand.u32 %v152, 4294901760
    %v959 = vsub.f32 %v152, %v958
    %v960 = vand.u32 %v959, 4294901760
    %961 = vmatmul.f32.gmra.mxu0 %v960
    %v962 = vpop.f32.mrf.mxu0
    %v963 = vadd.f32 %v757, %v962
    %v964 = vand.u32 %v155, 4294901760
    %v965 = vsub.f32 %v155, %v964
    %v966 = vand.u32 %v965, 4294901760
    %967 = vmatmul.f32.gmra.mxu0 %v966
    %v968 = vpop.f32.mrf.mxu0
    %v969 = vadd.f32 %v762, %v968
    %v970 = vand.u32 %v158, 4294901760
    %v971 = vsub.f32 %v158, %v970
    %v972 = vand.u32 %v971, 4294901760
    %973 = vmatmul.f32.gmra.mxu0 %v972
    %v974 = vpop.f32.mrf.mxu0
    %v975 = vadd.f32 %v767, %v974
    %v976 = vand.u32 %v161, 4294901760
    %v977 = vsub.f32 %v161, %v976
    %v978 = vand.u32 %v977, 4294901760
    %979 = vmatmul.f32.gmra.mxu0 %v978
    %v980 = vpop.f32.mrf.mxu0
    %v981 = vadd.f32 %v772, %v980
    %v982 = vand.u32 %v164, 4294901760
    %v983 = vsub.f32 %v164, %v982
    %v984 = vand.u32 %v983, 4294901760
    %985 = vmatmul.f32.gmra.mxu0 %v984
    %v986 = vpop.f32.mrf.mxu0
    %v987 = vadd.f32 %v777, %v986
    %v988 = vand.u32 %v167, 4294901760
    %v989 = vsub.f32 %v167, %v988
    %v990 = vand.u32 %v989, 4294901760
    %991 = vmatmul.f32.gmra.mxu0 %v990
    %v992 = vpop.f32.mrf.mxu0
    %v993 = vadd.f32 %v782, %v992
    %994 = vdwg.mxu0
    %995 = vmatpush.msra.mxu0 0.0
    %996 = vmatpush.msra.mxu0 0.0
    %997 = vmatpush.msra.mxu0 0.0
    %998 = vmatpush.msra.mxu0 0.0
    %999 = vmatpush.msra.mxu0 0.0
    %1000 = vmatpush.msra.mxu0 0.0
    %1001 = vmatpush.msra.mxu0 0.0
    %1002 = vmatpush.msra.mxu0 0.0
    %1003 = vmatpush.msra.mxu0 0.0
    %1004 = vmatpush.msra.mxu0 0.0
    %1005 = vmatpush.msra.mxu0 0.0
    %1006 = vmatpush.msra.mxu0 0.0
    %1007 = vmatpush.msra.mxu0 0.0
    %1008 = vmatpush.msra.mxu0 0.0
    %v1009 = vand.u32 %v171, 4294901760
    %v1010 = vsub.f32 %v171, %v1009
    %v1011 = vand.u32 %v1010, 4294901760
    %1012 = vmatpush.msra.mxu0 %v1011
    %v1013 = vand.u32 %v70, 4294901760
    %v1014 = vsub.f32 %v70, %v1013
    %v1015 = vand.u32 %v1014, 4294901760
    %1016 = vmatpush.msra.mxu0 %v1015
    %v1017 = vand.u32 %v74, 4294901760
    %1018 = vmatmul.f32.gmra.mxu0 %v1017
    %v1019 = vpop.f32.mrf.mxu0
    %v1020 = vadd.f32 %v807, %v1019
    %v1021 = vand.u32 %v77, 4294901760
    %1022 = vmatmul.f32.gmra.mxu0 %v1021
    %v1023 = vpop.f32.mrf.mxu0
    %v1024 = vadd.f32 %v813, %v1023
    %v1025 = vand.u32 %v80, 4294901760
    %1026 = vmatmul.f32.gmra.mxu0 %v1025
    %v1027 = vpop.f32.mrf.mxu0
    %v1028 = vadd.f32 %v819, %v1027
    %v1029 = vand.u32 %v83, 4294901760
    %1030 = vmatmul.f32.gmra.mxu0 %v1029
    %v1031 = vpop.f32.mrf.mxu0
    %v1032 = vadd.f32 %v825, %v1031
    %v1033 = vand.u32 %v86, 4294901760
    %1034 = vmatmul.f32.gmra.mxu0 %v1033
    %v1035 = vpop.f32.mrf.mxu0
    %v1036 = vadd.f32 %v831, %v1035
    %v1037 = vand.u32 %v89, 4294901760
    %1038 = vmatmul.f32.gmra.mxu0 %v1037
    %v1039 = vpop.f32.mrf.mxu0
    %v1040 = vadd.f32 %v837, %v1039
    %v1041 = vand.u32 %v92, 4294901760
    %1042 = vmatmul.f32.gmra.mxu0 %v1041
    %v1043 = vpop.f32.mrf.mxu0
    %v1044 = vadd.f32 %v843, %v1043
    %v1045 = vand.u32 %v95, 4294901760
    %1046 = vmatmul.f32.gmra.mxu0 %v1045
    %v1047 = vpop.f32.mrf.mxu0
    %v1048 = vadd.f32 %v849, %v1047
    %v1049 = vand.u32 %v98, 4294901760
    %1050 = vmatmul.f32.gmra.mxu0 %v1049
    %v1051 = vpop.f32.mrf.mxu0
    %v1052 = vadd.f32 %v855, %v1051
    %v1053 = vand.u32 %v101, 4294901760
    %1054 = vmatmul.f32.gmra.mxu0 %v1053
    %v1055 = vpop.f32.mrf.mxu0
    %v1056 = vadd.f32 %v861, %v1055
    %v1057 = vand.u32 %v104, 4294901760
    %1058 = vmatmul.f32.gmra.mxu0 %v1057
    %v1059 = vpop.f32.mrf.mxu0
    %v1060 = vadd.f32 %v867, %v1059
    %v1061 = vand.u32 %v107, 4294901760
    %1062 = vmatmul.f32.gmra.mxu0 %v1061
    %v1063 = vpop.f32.mrf.mxu0
    %v1064 = vadd.f32 %v873, %v1063
    %v1065 = vand.u32 %v110, 4294901760
    %1066 = vmatmul.f32.gmra.mxu0 %v1065
    %v1067 = vpop.f32.mrf.mxu0
    %v1068 = vadd.f32 %v879, %v1067
    %v1069 = vand.u32 %v113, 4294901760
    %1070 = vmatmul.f32.gmra.mxu0 %v1069
    %v1071 = vpop.f32.mrf.mxu0
    %v1072 = vadd.f32 %v885, %v1071
    %v1073 = vand.u32 %v116, 4294901760
    %1074 = vmatmul.f32.gmra.mxu0 %v1073
    %v1075 = vpop.f32.mrf.mxu0
    %v1076 = vadd.f32 %v891, %v1075
    %v1077 = vand.u32 %v119, 4294901760
    %1078 = vmatmul.f32.gmra.mxu0 %v1077
    %v1079 = vpop.f32.mrf.mxu0
    %v1080 = vadd.f32 %v897, %v1079
    %v1081 = vand.u32 %v122, 4294901760
    %1082 = vmatmul.f32.gmra.mxu0 %v1081
    %v1083 = vpop.f32.mrf.mxu0
    %v1084 = vadd.f32 %v903, %v1083
    %v1085 = vand.u32 %v125, 4294901760
    %1086 = vmatmul.f32.gmra.mxu0 %v1085
    %v1087 = vpop.f32.mrf.mxu0
    %v1088 = vadd.f32 %v909, %v1087
    %v1089 = vand.u32 %v128, 4294901760
    %1090 = vmatmul.f32.gmra.mxu0 %v1089
    %v1091 = vpop.f32.mrf.mxu0
    %v1092 = vadd.f32 %v915, %v1091
    %v1093 = vand.u32 %v131, 4294901760
    %1094 = vmatmul.f32.gmra.mxu0 %v1093
    %v1095 = vpop.f32.mrf.mxu0
    %v1096 = vadd.f32 %v921, %v1095
    %v1097 = vand.u32 %v134, 4294901760
    %1098 = vmatmul.f32.gmra.mxu0 %v1097
    %v1099 = vpop.f32.mrf.mxu0
    %v1100 = vadd.f32 %v927, %v1099
    %v1101 = vand.u32 %v137, 4294901760
    %1102 = vmatmul.f32.gmra.mxu0 %v1101
    %v1103 = vpop.f32.mrf.mxu0
    %v1104 = vadd.f32 %v933, %v1103
    %v1105 = vand.u32 %v140, 4294901760
    %1106 = vmatmul.f32.gmra.mxu0 %v1105
    %v1107 = vpop.f32.mrf.mxu0
    %v1108 = vadd.f32 %v939, %v1107
    %v1109 = vand.u32 %v143, 4294901760
    %1110 = vmatmul.f32.gmra.mxu0 %v1109
    %v1111 = vpop.f32.mrf.mxu0
    %v1112 = vadd.f32 %v945, %v1111
    %v1113 = vand.u32 %v146, 4294901760
    %1114 = vmatmul.f32.gmra.mxu0 %v1113
    %v1115 = vpop.f32.mrf.mxu0
    %v1116 = vadd.f32 %v951, %v1115
    %v1117 = vand.u32 %v149, 4294901760
    %1118 = vmatmul.f32.gmra.mxu0 %v1117
    %v1119 = vpop.f32.mrf.mxu0
    %v1120 = vadd.f32 %v957, %v1119
    %v1121 = vand.u32 %v152, 4294901760
    %1122 = vmatmul.f32.gmra.mxu0 %v1121
    %v1123 = vpop.f32.mrf.mxu0
    %v1124 = vadd.f32 %v963, %v1123
    %v1125 = vand.u32 %v155, 4294901760
    %1126 = vmatmul.f32.gmra.mxu0 %v1125
    %v1127 = vpop.f32.mrf.mxu0
    %v1128 = vadd.f32 %v969, %v1127
    %v1129 = vand.u32 %v158, 4294901760
    %1130 = vmatmul.f32.gmra.mxu0 %v1129
    %v1131 = vpop.f32.mrf.mxu0
    %v1132 = vadd.f32 %v975, %v1131
    %v1133 = vand.u32 %v161, 4294901760
    %1134 = vmatmul.f32.gmra.mxu0 %v1133
    %v1135 = vpop.f32.mrf.mxu0
    %v1136 = vadd.f32 %v981, %v1135
    %v1137 = vand.u32 %v164, 4294901760
    %1138 = vmatmul.f32.gmra.mxu0 %v1137
    %v1139 = vpop.f32.mrf.mxu0
    %v1140 = vadd.f32 %v987, %v1139
    %v1141 = vand.u32 %v167, 4294901760
    %1142 = vmatmul.f32.gmra.mxu0 %v1141
    %v1143 = vpop.f32.mrf.mxu0
    %v1144 = vadd.f32 %v993, %v1143
    %1145 = vdwg.mxu0
    %1146 = vmatpush.msra.mxu0 0.0
    %1147 = vmatpush.msra.mxu0 0.0
    %1148 = vmatpush.msra.mxu0 0.0
    %1149 = vmatpush.msra.mxu0 0.0
    %1150 = vmatpush.msra.mxu0 0.0
    %1151 = vmatpush.msra.mxu0 0.0
    %1152 = vmatpush.msra.mxu0 0.0
    %1153 = vmatpush.msra.mxu0 0.0
    %1154 = vmatpush.msra.mxu0 0.0
    %1155 = vmatpush.msra.mxu0 0.0
    %1156 = vmatpush.msra.mxu0 0.0
    %1157 = vmatpush.msra.mxu0 0.0
    %1158 = vmatpush.msra.mxu0 0.0
    %1159 = vmatpush.msra.mxu0 0.0
    %v1160 = vand.u32 %v171, 4294901760
    %1161 = vmatpush.msra.mxu0 %v1160
    %v1162 = vand.u32 %v70, 4294901760
    %1163 = vmatpush.msra.mxu0 %v1162
    %v1164 = vand.u32 %v74, 4294901760
    %1165 = vmatmul.f32.gmra.mxu0 %v1164
    %v1166 = vpop.f32.mrf.mxu0
    %v1167 = vadd.f32 %v1020, %v1166
    %v1168 = vand.u32 %v77, 4294901760
    %1169 = vmatmul.f32.gmra.mxu0 %v1168
    %v1170 = vpop.f32.mrf.mxu0
    %v1171 = vadd.f32 %v1024, %v1170
    %v1172 = vand.u32 %v80, 4294901760
    %1173 = vmatmul.f32.gmra.mxu0 %v1172
    %v1174 = vpop.f32.mrf.mxu0
    %v1175 = vadd.f32 %v1028, %v1174
    %v1176 = vand.u32 %v83, 4294901760
    %1177 = vmatmul.f32.gmra.mxu0 %v1176
    %v1178 = vpop.f32.mrf.mxu0
    %v1179 = vadd.f32 %v1032, %v1178
    %v1180 = vand.u32 %v86, 4294901760
    %1181 = vmatmul.f32.gmra.mxu0 %v1180
    %v1182 = vpop.f32.mrf.mxu0
    %v1183 = vadd.f32 %v1036, %v1182
    %v1184 = vand.u32 %v89, 4294901760
    %1185 = vmatmul.f32.gmra.mxu0 %v1184
    %v1186 = vpop.f32.mrf.mxu0
    %v1187 = vadd.f32 %v1040, %v1186
    %v1188 = vand.u32 %v92, 4294901760
    %1189 = vmatmul.f32.gmra.mxu0 %v1188
    %v1190 = vpop.f32.mrf.mxu0
    %v1191 = vadd.f32 %v1044, %v1190
    %v1192 = vand.u32 %v95, 4294901760
    %1193 = vmatmul.f32.gmra.mxu0 %v1192
    %v1194 = vpop.f32.mrf.mxu0
    %v1195 = vadd.f32 %v1048, %v1194
    %v1196 = vand.u32 %v98, 4294901760
    %1197 = vmatmul.f32.gmra.mxu0 %v1196
    %v1198 = vpop.f32.mrf.mxu0
    %v1199 = vadd.f32 %v1052, %v1198
    %v1200 = vand.u32 %v101, 4294901760
    %1201 = vmatmul.f32.gmra.mxu0 %v1200
    %v1202 = vpop.f32.mrf.mxu0
    %v1203 = vadd.f32 %v1056, %v1202
    %v1204 = vand.u32 %v104, 4294901760
    %1205 = vmatmul.f32.gmra.mxu0 %v1204
    %v1206 = vpop.f32.mrf.mxu0
    %v1207 = vadd.f32 %v1060, %v1206
    %v1208 = vand.u32 %v107, 4294901760
    %1209 = vmatmul.f32.gmra.mxu0 %v1208
    %v1210 = vpop.f32.mrf.mxu0
    %v1211 = vadd.f32 %v1064, %v1210
    %v1212 = vand.u32 %v110, 4294901760
    %1213 = vmatmul.f32.gmra.mxu0 %v1212
    %v1214 = vpop.f32.mrf.mxu0
    %v1215 = vadd.f32 %v1068, %v1214
    %v1216 = vand.u32 %v113, 4294901760
    %1217 = vmatmul.f32.gmra.mxu0 %v1216
    %v1218 = vpop.f32.mrf.mxu0
    %v1219 = vadd.f32 %v1072, %v1218
    %v1220 = vand.u32 %v116, 4294901760
    %1221 = vmatmul.f32.gmra.mxu0 %v1220
    %v1222 = vpop.f32.mrf.mxu0
    %v1223 = vadd.f32 %v1076, %v1222
    %v1224 = vand.u32 %v119, 4294901760
    %1225 = vmatmul.f32.gmra.mxu0 %v1224
    %v1226 = vpop.f32.mrf.mxu0
    %v1227 = vadd.f32 %v1080, %v1226
    %v1228 = vand.u32 %v122, 4294901760
    %1229 = vmatmul.f32.gmra.mxu0 %v1228
    %v1230 = vpop.f32.mrf.mxu0
    %v1231 = vadd.f32 %v1084, %v1230
    %v1232 = vand.u32 %v125, 4294901760
    %1233 = vmatmul.f32.gmra.mxu0 %v1232
    %v1234 = vpop.f32.mrf.mxu0
    %v1235 = vadd.f32 %v1088, %v1234
    %v1236 = vand.u32 %v128, 4294901760
    %1237 = vmatmul.f32.gmra.mxu0 %v1236
    %v1238 = vpop.f32.mrf.mxu0
    %v1239 = vadd.f32 %v1092, %v1238
    %v1240 = vand.u32 %v131, 4294901760
    %1241 = vmatmul.f32.gmra.mxu0 %v1240
    %v1242 = vpop.f32.mrf.mxu0
    %v1243 = vadd.f32 %v1096, %v1242
    %v1244 = vand.u32 %v134, 4294901760
    %1245 = vmatmul.f32.gmra.mxu0 %v1244
    %v1246 = vpop.f32.mrf.mxu0
    %v1247 = vadd.f32 %v1100, %v1246
    %v1248 = vand.u32 %v137, 4294901760
    %1249 = vmatmul.f32.gmra.mxu0 %v1248
    %v1250 = vpop.f32.mrf.mxu0
    %v1251 = vadd.f32 %v1104, %v1250
    %v1252 = vand.u32 %v140, 4294901760
    %1253 = vmatmul.f32.gmra.mxu0 %v1252
    %v1254 = vpop.f32.mrf.mxu0
    %v1255 = vadd.f32 %v1108, %v1254
    %v1256 = vand.u32 %v143, 4294901760
    %1257 = vmatmul.f32.gmra.mxu0 %v1256
    %v1258 = vpop.f32.mrf.mxu0
    %v1259 = vadd.f32 %v1112, %v1258
    %v1260 = vand.u32 %v146, 4294901760
    %1261 = vmatmul.f32.gmra.mxu0 %v1260
    %v1262 = vpop.f32.mrf.mxu0
    %v1263 = vadd.f32 %v1116, %v1262
    %v1264 = vand.u32 %v149, 4294901760
    %1265 = vmatmul.f32.gmra.mxu0 %v1264
    %v1266 = vpop.f32.mrf.mxu0
    %v1267 = vadd.f32 %v1120, %v1266
    %v1268 = vand.u32 %v152, 4294901760
    %1269 = vmatmul.f32.gmra.mxu0 %v1268
    %v1270 = vpop.f32.mrf.mxu0
    %v1271 = vadd.f32 %v1124, %v1270
    %v1272 = vand.u32 %v155, 4294901760
    %1273 = vmatmul.f32.gmra.mxu0 %v1272
    %v1274 = vpop.f32.mrf.mxu0
    %v1275 = vadd.f32 %v1128, %v1274
    %v1276 = vand.u32 %v158, 4294901760
    %1277 = vmatmul.f32.gmra.mxu0 %v1276
    %v1278 = vpop.f32.mrf.mxu0
    %v1279 = vadd.f32 %v1132, %v1278
    %v1280 = vand.u32 %v161, 4294901760
    %1281 = vmatmul.f32.gmra.mxu0 %v1280
    %v1282 = vpop.f32.mrf.mxu0
    %v1283 = vadd.f32 %v1136, %v1282
    %v1284 = vand.u32 %v164, 4294901760
    %1285 = vmatmul.f32.gmra.mxu0 %v1284
    %v1286 = vpop.f32.mrf.mxu0
    %v1287 = vadd.f32 %v1140, %v1286
    %v1288 = vand.u32 %v167, 4294901760
    %1289 = vmatmul.f32.gmra.mxu0 %v1288
    %v1290 = vpop.f32.mrf.mxu0
    %v1291 = vadd.f32 %v1144, %v1290
    %1292 = vdwg.mxu0
    %v1293 = vmax.f32 %v1167, 0.0
    %v1294 = vmax.f32 %v1171, 0.0
    %v1295 = vmax.f32 %v1175, 0.0
    %v1296 = vmax.f32 %v1179, 0.0
    %v1297 = vmax.f32 %v1183, 0.0
    %v1298 = vmax.f32 %v1187, 0.0
    %v1299 = vmax.f32 %v1191, 0.0
    %v1300 = vmax.f32 %v1195, 0.0
    %v1301 = vmax.f32 %v1199, 0.0
    %v1302 = vmax.f32 %v1203, 0.0
    %v1303 = vmax.f32 %v1207, 0.0
    %v1304 = vmax.f32 %v1211, 0.0
    %v1305 = vmax.f32 %v1215, 0.0
    %v1306 = vmax.f32 %v1219, 0.0
    %v1307 = vmax.f32 %v1223, 0.0
    %v1308 = vmax.f32 %v1227, 0.0
    %v1309 = vmax.f32 %v1231, 0.0
    %v1310 = vmax.f32 %v1235, 0.0
    %v1311 = vmax.f32 %v1239, 0.0
    %v1312 = vmax.f32 %v1243, 0.0
    %v1313 = vmax.f32 %v1247, 0.0
    %v1314 = vmax.f32 %v1251, 0.0
    %v1315 = vmax.f32 %v1255, 0.0
    %v1316 = vmax.f32 %v1259, 0.0
    %v1317 = vmax.f32 %v1263, 0.0
    %v1318 = vmax.f32 %v1267, 0.0
    %v1319 = vmax.f32 %v1271, 0.0
    %v1320 = vmax.f32 %v1275, 0.0
    %v1321 = vmax.f32 %v1279, 0.0
    %v1322 = vmax.f32 %v1283, 0.0
    %v1323 = vmax.f32 %v1287, 0.0
    %v1324 = vmax.f32 %v1291, 0.0
    %v1325 = vpack.c.bf16 %v1294, %v1293
    %v1326 = vpack.c.bf16 %v1296, %v1295
    %v1327 = vpack.c.bf16 %v1298, %v1297
    %v1328 = vpack.c.bf16 %v1300, %v1299
    %v1329 = vpack.c.bf16 %v1302, %v1301
    %v1330 = vpack.c.bf16 %v1304, %v1303
    %v1331 = vpack.c.bf16 %v1306, %v1305
    %v1332 = vpack.c.bf16 %v1308, %v1307
    %v1333 = vpack.c.bf16 %v1310, %v1309
    %v1334 = vpack.c.bf16 %v1312, %v1311
    %v1335 = vpack.c.bf16 %v1314, %v1313
    %v1336 = vpack.c.bf16 %v1316, %v1315
    %v1337 = vpack.c.bf16 %v1318, %v1317
    %v1338 = vpack.c.bf16 %v1320, %v1319
    %v1339 = vpack.c.bf16 %v1322, %v1321
    %v1340 = vpack.c.bf16 %v1324, %v1323
    %v1341 = vld [vmem:[#allocation2] sm:$0xff]
    %v1342 = vld [vmem:[#allocation2 + $0x8] sm:$0xff]
    %v1343 = vld [vmem:[#allocation2 + $0x10] sm:$0xff]
    %v1344 = vld [vmem:[#allocation2 + $0x18] sm:$0xff]
    %v1345 = vld [vmem:[#allocation2 + $0x20] sm:$0x11]
    %v1351 = vunpack.c.l.b16 %v1341
    %v1352 = vunpack.c.h.b16 %v1341
    %v1353 = vunpack.c.l.b16 %v1342
    %v1354 = vunpack.c.h.b16 %v1342
    %v1355 = vunpack.c.l.b16 %v1343
    %v1356 = vunpack.c.h.b16 %v1343
    %v1357 = vunpack.c.l.b16 %v1344
    %v1358 = vunpack.c.h.b16 %v1344
    %v1359 = vunpack.c.l.b16 %v1345
    %v1360 = vunpack.c.h.b16 %v1345
    %v1361 = vpack.c.b16 %v1353, %v1351
    %v1362 = vpack.c.b16 %v1354, %v1352
    %v1363 = vpack.c.b16 %v1357, %v1355
    %v1364 = vpack.c.b16 %v1358, %v1356
    %v1365 = vpack.c.b16 %v1359, %v1359
    %v1366 = vpack.c.b16 %v1360, %v1360
    %vm1371 = vcmask 269312
    %v1373 = vsel %vm1371, %v1325, 0
    %v1376 = vsel %vm1371, %v1326, 0
    %v1379 = vsel %vm1371, %v1327, 0
    %v1382 = vsel %vm1371, %v1328, 0
    %v1385 = vsel %vm1371, %v1329, 0
    %v1388 = vsel %vm1371, %v1330, 0
    %v1391 = vsel %vm1371, %v1331, 0
    %v1394 = vsel %vm1371, %v1332, 0
    %v1397 = vsel %vm1371, %v1333, 0
    %v1400 = vsel %vm1371, %v1334, 0
    %v1403 = vsel %vm1371, %v1335, 0
    %v1406 = vsel %vm1371, %v1336, 0
    %v1409 = vsel %vm1371, %v1337, 0
    %v1412 = vsel %vm1371, %v1338, 0
    %v1415 = vsel %vm1371, %v1339, 0
    %v1418 = vsel %vm1371, %v1340, 0
    %vm1420 = vcmask 1040384
    %v1421 = vsel 0, 4294967295, 65535
    %v1422 = vsel %vm1420, %v1421, 0
    %v1424 = vand.u32 %v1365, %v1422
    %v1427 = vand.u32 %v1366, %v1422
    %1429 = vmatpush.bf16.msra.mxu0 0
    %1430 = vmatpush.bf16.msra.mxu0 0
    %1431 = vmatpush.bf16.msra.mxu0 0
    %1432 = vmatpush.bf16.msra.mxu0 0
    %1433 = vmatpush.bf16.msra.mxu0 0
    %1434 = vmatpush.bf16.msra.mxu0 %v1424
    %1435 = vmatpush.bf16.msra.mxu0 %v1363
    %1436 = vmatpush.bf16.msra.mxu0 %v1361
    %1437 = vmatmul.bf16.gmra.mxu0 %v1373
    %v1438 = vpop.f32.mrf.mxu0
    %v1439 = vadd.f32 0.0, %v1438
    %v1440 = vpop.f32.mrf.mxu0
    %v1441 = vadd.f32 0.0, %v1440
    %1442 = vmatmul.bf16.gmra.mxu0 %v1376
    %v1443 = vpop.f32.mrf.mxu0
    %v1444 = vadd.f32 0.0, %v1443
    %v1445 = vpop.f32.mrf.mxu0
    %v1446 = vadd.f32 0.0, %v1445
    %1447 = vmatmul.bf16.gmra.mxu0 %v1379
    %v1448 = vpop.f32.mrf.mxu0
    %v1449 = vadd.f32 0.0, %v1448
    %v1450 = vpop.f32.mrf.mxu0
    %v1451 = vadd.f32 0.0, %v1450
    %1452 = vmatmul.bf16.gmra.mxu0 %v1382
    %v1453 = vpop.f32.mrf.mxu0
    %v1454 = vadd.f32 0.0, %v1453
    %v1455 = vpop.f32.mrf.mxu0
    %v1456 = vadd.f32 0.0, %v1455
    %1457 = vmatmul.bf16.gmra.mxu0 %v1385
    %v1458 = vpop.f32.mrf.mxu0
    %v1459 = vadd.f32 0.0, %v1458
    %v1460 = vpop.f32.mrf.mxu0
    %v1461 = vadd.f32 0.0, %v1460
    %1462 = vmatmul.bf16.gmra.mxu0 %v1388
    %v1463 = vpop.f32.mrf.mxu0
    %v1464 = vadd.f32 0.0, %v1463
    %v1465 = vpop.f32.mrf.mxu0
    %v1466 = vadd.f32 0.0, %v1465
    %1467 = vmatmul.bf16.gmra.mxu0 %v1391
    %v1468 = vpop.f32.mrf.mxu0
    %v1469 = vadd.f32 0.0, %v1468
    %v1470 = vpop.f32.mrf.mxu0
    %v1471 = vadd.f32 0.0, %v1470
    %1472 = vmatmul.bf16.gmra.mxu0 %v1394
    %v1473 = vpop.f32.mrf.mxu0
    %v1474 = vadd.f32 0.0, %v1473
    %v1475 = vpop.f32.mrf.mxu0
    %v1476 = vadd.f32 0.0, %v1475
    %1477 = vmatmul.bf16.gmra.mxu0 %v1397
    %v1478 = vpop.f32.mrf.mxu0
    %v1479 = vadd.f32 0.0, %v1478
    %v1480 = vpop.f32.mrf.mxu0
    %v1481 = vadd.f32 0.0, %v1480
    %1482 = vmatmul.bf16.gmra.mxu0 %v1400
    %v1483 = vpop.f32.mrf.mxu0
    %v1484 = vadd.f32 0.0, %v1483
    %v1485 = vpop.f32.mrf.mxu0
    %v1486 = vadd.f32 0.0, %v1485
    %1487 = vmatmul.bf16.gmra.mxu0 %v1403
    %v1488 = vpop.f32.mrf.mxu0
    %v1489 = vadd.f32 0.0, %v1488
    %v1490 = vpop.f32.mrf.mxu0
    %v1491 = vadd.f32 0.0, %v1490
    %1492 = vmatmul.bf16.gmra.mxu0 %v1406
    %v1493 = vpop.f32.mrf.mxu0
    %v1494 = vadd.f32 0.0, %v1493
    %v1495 = vpop.f32.mrf.mxu0
    %v1496 = vadd.f32 0.0, %v1495
    %1497 = vmatmul.bf16.gmra.mxu0 %v1409
    %v1498 = vpop.f32.mrf.mxu0
    %v1499 = vadd.f32 0.0, %v1498
    %v1500 = vpop.f32.mrf.mxu0
    %v1501 = vadd.f32 0.0, %v1500
    %1502 = vmatmul.bf16.gmra.mxu0 %v1412
    %v1503 = vpop.f32.mrf.mxu0
    %v1504 = vadd.f32 0.0, %v1503
    %v1505 = vpop.f32.mrf.mxu0
    %v1506 = vadd.f32 0.0, %v1505
    %1507 = vmatmul.bf16.gmra.mxu0 %v1415
    %v1508 = vpop.f32.mrf.mxu0
    %v1509 = vadd.f32 0.0, %v1508
    %v1510 = vpop.f32.mrf.mxu0
    %v1511 = vadd.f32 0.0, %v1510
    %1512 = vmatmul.bf16.gmra.mxu0 %v1418
    %v1513 = vpop.f32.mrf.mxu0
    %v1514 = vadd.f32 0.0, %v1513
    %v1515 = vpop.f32.mrf.mxu0
    %v1516 = vadd.f32 0.0, %v1515
    %1517 = vdwg.mxu0
    %1518 = vmatpush.bf16.msra.mxu0 0
    %1519 = vmatpush.bf16.msra.mxu0 0
    %1520 = vmatpush.bf16.msra.mxu0 0
    %1521 = vmatpush.bf16.msra.mxu0 0
    %1522 = vmatpush.bf16.msra.mxu0 0
    %1523 = vmatpush.bf16.msra.mxu0 %v1427
    %1524 = vmatpush.bf16.msra.mxu0 %v1364
    %1525 = vmatpush.bf16.msra.mxu0 %v1362
    %1526 = vmatmul.bf16.gmra.mxu0 %v1373
    %v1527 = vpop.f32.mrf.mxu0
    %v1528 = vadd.f32 0.0, %v1527
    %v1529 = vpop.f32.mrf.mxu0
    %v1530 = vadd.f32 0.0, %v1529
    %1531 = vmatmul.bf16.gmra.mxu0 %v1376
    %v1532 = vpop.f32.mrf.mxu0
    %v1533 = vadd.f32 0.0, %v1532
    %v1534 = vpop.f32.mrf.mxu0
    %v1535 = vadd.f32 0.0, %v1534
    %1536 = vmatmul.bf16.gmra.mxu0 %v1379
    %v1537 = vpop.f32.mrf.mxu0
    %v1538 = vadd.f32 0.0, %v1537
    %v1539 = vpop.f32.mrf.mxu0
    %v1540 = vadd.f32 0.0, %v1539
    %1541 = vmatmul.bf16.gmra.mxu0 %v1382
    %v1542 = vpop.f32.mrf.mxu0
    %v1543 = vadd.f32 0.0, %v1542
    %v1544 = vpop.f32.mrf.mxu0
    %v1545 = vadd.f32 0.0, %v1544
    %1546 = vmatmul.bf16.gmra.mxu0 %v1385
    %v1547 = vpop.f32.mrf.mxu0
    %v1548 = vadd.f32 0.0, %v1547
    %v1549 = vpop.f32.mrf.mxu0
    %v1550 = vadd.f32 0.0, %v1549
    %1551 = vmatmul.bf16.gmra.mxu0 %v1388
    %v1552 = vpop.f32.mrf.mxu0
    %v1553 = vadd.f32 0.0, %v1552
    %v1554 = vpop.f32.mrf.mxu0
    %v1555 = vadd.f32 0.0, %v1554
    %1556 = vmatmul.bf16.gmra.mxu0 %v1391
    %v1557 = vpop.f32.mrf.mxu0
    %v1558 = vadd.f32 0.0, %v1557
    %v1559 = vpop.f32.mrf.mxu0
    %v1560 = vadd.f32 0.0, %v1559
    %1561 = vmatmul.bf16.gmra.mxu0 %v1394
    %v1562 = vpop.f32.mrf.mxu0
    %v1563 = vadd.f32 0.0, %v1562
    %v1564 = vpop.f32.mrf.mxu0
    %v1565 = vadd.f32 0.0, %v1564
    %1566 = vmatmul.bf16.gmra.mxu0 %v1397
    %v1567 = vpop.f32.mrf.mxu0
    %v1568 = vadd.f32 0.0, %v1567
    %v1569 = vpop.f32.mrf.mxu0
    %v1570 = vadd.f32 0.0, %v1569
    %1571 = vmatmul.bf16.gmra.mxu0 %v1400
    %v1572 = vpop.f32.mrf.mxu0
    %v1573 = vadd.f32 0.0, %v1572
    %v1574 = vpop.f32.mrf.mxu0
    %v1575 = vadd.f32 0.0, %v1574
    %1576 = vmatmul.bf16.gmra.mxu0 %v1403
    %v1577 = vpop.f32.mrf.mxu0
    %v1578 = vadd.f32 0.0, %v1577
    %v1579 = vpop.f32.mrf.mxu0
    %v1580 = vadd.f32 0.0, %v1579
    %1581 = vmatmul.bf16.gmra.mxu0 %v1406
    %v1582 = vpop.f32.mrf.mxu0
    %v1583 = vadd.f32 0.0, %v1582
    %v1584 = vpop.f32.mrf.mxu0
    %v1585 = vadd.f32 0.0, %v1584
    %1586 = vmatmul.bf16.gmra.mxu0 %v1409
    %v1587 = vpop.f32.mrf.mxu0
    %v1588 = vadd.f32 0.0, %v1587
    %v1589 = vpop.f32.mrf.mxu0
    %v1590 = vadd.f32 0.0, %v1589
    %1591 = vmatmul.bf16.gmra.mxu0 %v1412
    %v1592 = vpop.f32.mrf.mxu0
    %v1593 = vadd.f32 0.0, %v1592
    %v1594 = vpop.f32.mrf.mxu0
    %v1595 = vadd.f32 0.0, %v1594
    %1596 = vmatmul.bf16.gmra.mxu0 %v1415
    %v1597 = vpop.f32.mrf.mxu0
    %v1598 = vadd.f32 0.0, %v1597
    %v1599 = vpop.f32.mrf.mxu0
    %v1600 = vadd.f32 0.0, %v1599
    %1601 = vmatmul.bf16.gmra.mxu0 %v1418
    %v1602 = vpop.f32.mrf.mxu0
    %v1603 = vadd.f32 0.0, %v1602
    %v1604 = vpop.f32.mrf.mxu0
    %v1605 = vadd.f32 0.0, %v1604
    %1606 = vdwg.mxu0
    %v1607 = vpack.c.bf16 %v39, %v38
    %v1608 = vpack.c.bf16 %v41, %v40
    %v1609 = vpack.c.bf16 %v43, %v42
    %v1610 = vpack.c.bf16 %v45, %v44
    %v1611 = vpack.c.bf16 %v47, %v46
    %v1612 = vpack.c.bf16 %v49, %v48
    %v1613 = vpack.c.bf16 %v51, %v50
    %v1614 = vpack.c.bf16 %v53, %v52
    %v1615 = vpack.c.bf16 %v55, %v54
    %v1616 = vpack.c.bf16 %v57, %v56
    %v1617 = vpack.c.bf16 %v59, %v58
    %v1618 = vpack.c.bf16 %v61, %v60
    %v1619 = vpack.c.bf16 %v63, %v62
    %v1620 = vpack.c.bf16 %v65, %v64
    %v1621 = vpack.c.bf16 %v67, %v66
    %v1622 = vpack.c.bf16 %v69, %v68
    %v1623 = vld [vmem:[%s3] sm:$0xff]
    %v1624 = vld [vmem:[%s3 + $0x8] sm:$0x33]
    %v1627 = vunpack.c.l.b16 %v1623
    %v1628 = vunpack.c.h.b16 %v1623
    %v1629 = vunpack.c.l.b16 %v1624
    %v1630 = vunpack.c.h.b16 %v1624
    %v1631 = vpack.c.b16 %v1629, %v1627
    %v1632 = vpack.c.b16 %v1630, %v1628
    %v1634 = vsel %vm72, %v1607, 0
    %v1637 = vsel %vm72, %v1608, 0
    %v1640 = vsel %vm72, %v1609, 0
    %v1643 = vsel %vm72, %v1610, 0
    %v1646 = vsel %vm72, %v1611, 0
    %v1649 = vsel %vm72, %v1612, 0
    %v1652 = vsel %vm72, %v1613, 0
    %v1655 = vsel %vm72, %v1614, 0
    %v1658 = vsel %vm72, %v1615, 0
    %v1661 = vsel %vm72, %v1616, 0
    %v1664 = vsel %vm72, %v1617, 0
    %v1667 = vsel %vm72, %v1618, 0
    %v1670 = vsel %vm72, %v1619, 0
    %v1673 = vsel %vm72, %v1620, 0
    %v1676 = vsel %vm72, %v1621, 0
    %v1679 = vsel %vm72, %v1622, 0
    %vm1681 = vcmask 1044480
    %vm1682 = vcmask 1045504
    %v1683 = vsel %vm1681, 4294967295, 65535
    %v1684 = vsel %vm1682, %v1683, 0
    %v1686 = vand.u32 %v1631, %v1684
    %v1689 = vand.u32 %v1632, %v1684
    %1691 = vmatpush.bf16.msra.mxu0 0
    %1692 = vmatpush.bf16.msra.mxu0 0
    %1693 = vmatpush.bf16.msra.mxu0 0
    %1694 = vmatpush.bf16.msra.mxu0 0
    %1695 = vmatpush.bf16.msra.mxu0 0
    %1696 = vmatpush.bf16.msra.mxu0 0
    %1697 = vmatpush.bf16.msra.mxu0 0
    %1698 = vmatpush.bf16.msra.mxu0 %v1686
    %1699 = vmatmul.bf16.gmra.mxu0 %v1634
    %v1700 = vpop.f32.mrf.mxu0
    %v1701 = vadd.f32 0.0, %v1700
    %v1702 = vpop.f32.mrf.mxu0
    %v1703 = vadd.f32 0.0, %v1702
    %1704 = vmatmul.bf16.gmra.mxu0 %v1637
    %v1705 = vpop.f32.mrf.mxu0
    %v1706 = vadd.f32 0.0, %v1705
    %v1707 = vpop.f32.mrf.mxu0
    %v1708 = vadd.f32 0.0, %v1707
    %1709 = vmatmul.bf16.gmra.mxu0 %v1640
    %v1710 = vpop.f32.mrf.mxu0
    %v1711 = vadd.f32 0.0, %v1710
    %v1712 = vpop.f32.mrf.mxu0
    %v1713 = vadd.f32 0.0, %v1712
    %1714 = vmatmul.bf16.gmra.mxu0 %v1643
    %v1715 = vpop.f32.mrf.mxu0
    %v1716 = vadd.f32 0.0, %v1715
    %v1717 = vpop.f32.mrf.mxu0
    %v1718 = vadd.f32 0.0, %v1717
    %1719 = vmatmul.bf16.gmra.mxu0 %v1646
    %v1720 = vpop.f32.mrf.mxu0
    %v1721 = vadd.f32 0.0, %v1720
    %v1722 = vpop.f32.mrf.mxu0
    %v1723 = vadd.f32 0.0, %v1722
    %1724 = vmatmul.bf16.gmra.mxu0 %v1649
    %v1725 = vpop.f32.mrf.mxu0
    %v1726 = vadd.f32 0.0, %v1725
    %v1727 = vpop.f32.mrf.mxu0
    %v1728 = vadd.f32 0.0, %v1727
    %1729 = vmatmul.bf16.gmra.mxu0 %v1652
    %v1730 = vpop.f32.mrf.mxu0
    %v1731 = vadd.f32 0.0, %v1730
    %v1732 = vpop.f32.mrf.mxu0
    %v1733 = vadd.f32 0.0, %v1732
    %1734 = vmatmul.bf16.gmra.mxu0 %v1655
    %v1735 = vpop.f32.mrf.mxu0
    %v1736 = vadd.f32 0.0, %v1735
    %v1737 = vpop.f32.mrf.mxu0
    %v1738 = vadd.f32 0.0, %v1737
    %1739 = vmatmul.bf16.gmra.mxu0 %v1658
    %v1740 = vpop.f32.mrf.mxu0
    %v1741 = vadd.f32 0.0, %v1740
    %v1742 = vpop.f32.mrf.mxu0
    %v1743 = vadd.f32 0.0, %v1742
    %1744 = vmatmul.bf16.gmra.mxu0 %v1661
    %v1745 = vpop.f32.mrf.mxu0
    %v1746 = vadd.f32 0.0, %v1745
    %v1747 = vpop.f32.mrf.mxu0
    %v1748 = vadd.f32 0.0, %v1747
    %1749 = vmatmul.bf16.gmra.mxu0 %v1664
    %v1750 = vpop.f32.mrf.mxu0
    %v1751 = vadd.f32 0.0, %v1750
    %v1752 = vpop.f32.mrf.mxu0
    %v1753 = vadd.f32 0.0, %v1752
    %1754 = vmatmul.bf16.gmra.mxu0 %v1667
    %v1755 = vpop.f32.mrf.mxu0
    %v1756 = vadd.f32 0.0, %v1755
    %v1757 = vpop.f32.mrf.mxu0
    %v1758 = vadd.f32 0.0, %v1757
    %1759 = vmatmul.bf16.gmra.mxu0 %v1670
    %v1760 = vpop.f32.mrf.mxu0
    %v1761 = vadd.f32 0.0, %v1760
    %v1762 = vpop.f32.mrf.mxu0
    %v1763 = vadd.f32 0.0, %v1762
    %1764 = vmatmul.bf16.gmra.mxu0 %v1673
    %v1765 = vpop.f32.mrf.mxu0
    %v1766 = vadd.f32 0.0, %v1765
    %v1767 = vpop.f32.mrf.mxu0
    %v1768 = vadd.f32 0.0, %v1767
    %1769 = vmatmul.bf16.gmra.mxu0 %v1676
    %v1770 = vpop.f32.mrf.mxu0
    %v1771 = vadd.f32 0.0, %v1770
    %v1772 = vpop.f32.mrf.mxu0
    %v1773 = vadd.f32 0.0, %v1772
    %1774 = vmatmul.bf16.gmra.mxu0 %v1679
    %v1775 = vpop.f32.mrf.mxu0
    %v1776 = vadd.f32 0.0, %v1775
    %v1777 = vpop.f32.mrf.mxu0
    %v1778 = vadd.f32 0.0, %v1777
    %1779 = vdwg.mxu0
    %1780 = vmatpush.bf16.msra.mxu0 0
    %1781 = vmatpush.bf16.msra.mxu0 0
    %1782 = vmatpush.bf16.msra.mxu0 0
    %1783 = vmatpush.bf16.msra.mxu0 0
    %1784 = vmatpush.bf16.msra.mxu0 0
    %1785 = vmatpush.bf16.msra.mxu0 0
    %1786 = vmatpush.bf16.msra.mxu0 0
    %1787 = vmatpush.bf16.msra.mxu0 %v1689
    %1788 = vmatmul.bf16.gmra.mxu0 %v1634
    %v1789 = vpop.f32.mrf.mxu0
    %v1790 = vadd.f32 0.0, %v1789
    %v1791 = vpop.f32.mrf.mxu0
    %v1792 = vadd.f32 0.0, %v1791
    %1793 = vmatmul.bf16.gmra.mxu0 %v1637
    %v1794 = vpop.f32.mrf.mxu0
    %v1795 = vadd.f32 0.0, %v1794
    %v1796 = vpop.f32.mrf.mxu0
    %v1797 = vadd.f32 0.0, %v1796
    %1798 = vmatmul.bf16.gmra.mxu0 %v1640
    %v1799 = vpop.f32.mrf.mxu0
    %v1800 = vadd.f32 0.0, %v1799
    %v1801 = vpop.f32.mrf.mxu0
    %v1802 = vadd.f32 0.0, %v1801
    %1803 = vmatmul.bf16.gmra.mxu0 %v1643
    %v1804 = vpop.f32.mrf.mxu0
    %v1805 = vadd.f32 0.0, %v1804
    %v1806 = vpop.f32.mrf.mxu0
    %v1807 = vadd.f32 0.0, %v1806
    %1808 = vmatmul.bf16.gmra.mxu0 %v1646
    %v1809 = vpop.f32.mrf.mxu0
    %v1810 = vadd.f32 0.0, %v1809
    %v1811 = vpop.f32.mrf.mxu0
    %v1812 = vadd.f32 0.0, %v1811
    %1813 = vmatmul.bf16.gmra.mxu0 %v1649
    %v1814 = vpop.f32.mrf.mxu0
    %v1815 = vadd.f32 0.0, %v1814
    %v1816 = vpop.f32.mrf.mxu0
    %v1817 = vadd.f32 0.0, %v1816
    %1818 = vmatmul.bf16.gmra.mxu0 %v1652
    %v1819 = vpop.f32.mrf.mxu0
    %v1820 = vadd.f32 0.0, %v1819
    %v1821 = vpop.f32.mrf.mxu0
    %v1822 = vadd.f32 0.0, %v1821
    %1823 = vmatmul.bf16.gmra.mxu0 %v1655
    %v1824 = vpop.f32.mrf.mxu0
    %v1825 = vadd.f32 0.0, %v1824
    %v1826 = vpop.f32.mrf.mxu0
    %v1827 = vadd.f32 0.0, %v1826
    %1828 = vmatmul.bf16.gmra.mxu0 %v1658
    %v1829 = vpop.f32.mrf.mxu0
    %v1830 = vadd.f32 0.0, %v1829
    %v1831 = vpop.f32.mrf.mxu0
    %v1832 = vadd.f32 0.0, %v1831
    %1833 = vmatmul.bf16.gmra.mxu0 %v1661
    %v1834 = vpop.f32.mrf.mxu0
    %v1835 = vadd.f32 0.0, %v1834
    %v1836 = vpop.f32.mrf.mxu0
    %v1837 = vadd.f32 0.0, %v1836
    %1838 = vmatmul.bf16.gmra.mxu0 %v1664
    %v1839 = vpop.f32.mrf.mxu0
    %v1840 = vadd.f32 0.0, %v1839
    %v1841 = vpop.f32.mrf.mxu0
    %v1842 = vadd.f32 0.0, %v1841
    %1843 = vmatmul.bf16.gmra.mxu0 %v1667
    %v1844 = vpop.f32.mrf.mxu0
    %v1845 = vadd.f32 0.0, %v1844
    %v1846 = vpop.f32.mrf.mxu0
    %v1847 = vadd.f32 0.0, %v1846
    %1848 = vmatmul.bf16.gmra.mxu0 %v1670
    %v1849 = vpop.f32.mrf.mxu0
    %v1850 = vadd.f32 0.0, %v1849
    %v1851 = vpop.f32.mrf.mxu0
    %v1852 = vadd.f32 0.0, %v1851
    %1853 = vmatmul.bf16.gmra.mxu0 %v1673
    %v1854 = vpop.f32.mrf.mxu0
    %v1855 = vadd.f32 0.0, %v1854
    %v1856 = vpop.f32.mrf.mxu0
    %v1857 = vadd.f32 0.0, %v1856
    %1858 = vmatmul.bf16.gmra.mxu0 %v1676
    %v1859 = vpop.f32.mrf.mxu0
    %v1860 = vadd.f32 0.0, %v1859
    %v1861 = vpop.f32.mrf.mxu0
    %v1862 = vadd.f32 0.0, %v1861
    %1863 = vmatmul.bf16.gmra.mxu0 %v1679
    %v1864 = vpop.f32.mrf.mxu0
    %v1865 = vadd.f32 0.0, %v1864
    %v1866 = vpop.f32.mrf.mxu0
    %v1867 = vadd.f32 0.0, %v1866
    %1868 = vdwg.mxu0
    %v1869 = vmul.f32 %v1439, %v1701
    %v1870 = vmul.f32 %v1528, %v1790
    %v1871 = vmul.f32 %v1441, %v1703
    %v1872 = vmul.f32 %v1530, %v1792
    %v1873 = vmul.f32 %v1444, %v1706
    %v1874 = vmul.f32 %v1533, %v1795
    %v1875 = vmul.f32 %v1446, %v1708
    %v1876 = vmul.f32 %v1535, %v1797
    %v1877 = vmul.f32 %v1449, %v1711
    %v1878 = vmul.f32 %v1538, %v1800
    %v1879 = vmul.f32 %v1451, %v1713
    %v1880 = vmul.f32 %v1540, %v1802
    %v1881 = vmul.f32 %v1454, %v1716
    %v1882 = vmul.f32 %v1543, %v1805
    %v1883 = vmul.f32 %v1456, %v1718
    %v1884 = vmul.f32 %v1545, %v1807
    %v1885 = vmul.f32 %v1459, %v1721
    %v1886 = vmul.f32 %v1548, %v1810
    %v1887 = vmul.f32 %v1461, %v1723
    %v1888 = vmul.f32 %v1550, %v1812
    %v1889 = vmul.f32 %v1464, %v1726
    %v1890 = vmul.f32 %v1553, %v1815
    %v1891 = vmul.f32 %v1466, %v1728
    %v1892 = vmul.f32 %v1555, %v1817
    %v1893 = vmul.f32 %v1469, %v1731
    %v1894 = vmul.f32 %v1558, %v1820
    %v1895 = vmul.f32 %v1471, %v1733
    %v1896 = vmul.f32 %v1560, %v1822
    %v1897 = vmul.f32 %v1474, %v1736
    %v1898 = vmul.f32 %v1563, %v1825
    %v1899 = vmul.f32 %v1476, %v1738
    %v1900 = vmul.f32 %v1565, %v1827
    %v1901 = vmul.f32 %v1479, %v1741
    %v1902 = vmul.f32 %v1568, %v1830
    %v1903 = vmul.f32 %v1481, %v1743
    %v1904 = vmul.f32 %v1570, %v1832
    %v1905 = vmul.f32 %v1484, %v1746
    %v1906 = vmul.f32 %v1573, %v1835
    %v1907 = vmul.f32 %v1486, %v1748
    %v1908 = vmul.f32 %v1575, %v1837
    %v1909 = vmul.f32 %v1489, %v1751
    %v1910 = vmul.f32 %v1578, %v1840
    %v1911 = vmul.f32 %v1491, %v1753
    %v1912 = vmul.f32 %v1580, %v1842
    %v1913 = vmul.f32 %v1494, %v1756
    %v1914 = vmul.f32 %v1583, %v1845
    %v1915 = vmul.f32 %v1496, %v1758
    %v1916 = vmul.f32 %v1585, %v1847
    %v1917 = vmul.f32 %v1499, %v1761
    %v1918 = vmul.f32 %v1588, %v1850
    %v1919 = vmul.f32 %v1501, %v1763
    %v1920 = vmul.f32 %v1590, %v1852
    %v1921 = vmul.f32 %v1504, %v1766
    %v1922 = vmul.f32 %v1593, %v1855
    %v1923 = vmul.f32 %v1506, %v1768
    %v1924 = vmul.f32 %v1595, %v1857
    %v1925 = vmul.f32 %v1509, %v1771
    %v1926 = vmul.f32 %v1598, %v1860
    %v1927 = vmul.f32 %v1511, %v1773
    %v1928 = vmul.f32 %v1600, %v1862
    %v1929 = vmul.f32 %v1514, %v1776
    %v1930 = vmul.f32 %v1603, %v1865
    %v1931 = vmul.f32 %v1516, %v1778
    %v1932 = vmul.f32 %v1605, %v1867
    %v1933 = vpack.c.bf16 %v1871, %v1869
    %v1934 = vpack.c.bf16 %v1872, %v1870
    %v1935 = vpack.c.bf16 %v1875, %v1873
    %v1936 = vpack.c.bf16 %v1876, %v1874
    %v1937 = vpack.c.bf16 %v1879, %v1877
    %v1938 = vpack.c.bf16 %v1880, %v1878
    %v1939 = vpack.c.bf16 %v1883, %v1881
    %v1940 = vpack.c.bf16 %v1884, %v1882
    %v1941 = vpack.c.bf16 %v1887, %v1885
    %v1942 = vpack.c.bf16 %v1888, %v1886
    %v1943 = vpack.c.bf16 %v1891, %v1889
    %v1944 = vpack.c.bf16 %v1892, %v1890
    %v1945 = vpack.c.bf16 %v1895, %v1893
    %v1946 = vpack.c.bf16 %v1896, %v1894
    %v1947 = vpack.c.bf16 %v1899, %v1897
    %v1948 = vpack.c.bf16 %v1900, %v1898
    %v1949 = vpack.c.bf16 %v1903, %v1901
    %v1950 = vpack.c.bf16 %v1904, %v1902
    %v1951 = vpack.c.bf16 %v1907, %v1905
    %v1952 = vpack.c.bf16 %v1908, %v1906
    %v1953 = vpack.c.bf16 %v1911, %v1909
    %v1954 = vpack.c.bf16 %v1912, %v1910
    %v1955 = vpack.c.bf16 %v1915, %v1913
    %v1956 = vpack.c.bf16 %v1916, %v1914
    %v1957 = vpack.c.bf16 %v1919, %v1917
    %v1958 = vpack.c.bf16 %v1920, %v1918
    %v1959 = vpack.c.bf16 %v1923, %v1921
    %v1960 = vpack.c.bf16 %v1924, %v1922
    %v1961 = vpack.c.bf16 %v1927, %v1925
    %v1962 = vpack.c.bf16 %v1928, %v1926
    %v1963 = vpack.c.bf16 %v1931, %v1929
    %v1964 = vpack.c.bf16 %v1932, %v1930
    %v1965 = vld [vmem:[%s4] sm:$0xff]
    %v1966 = vld [vmem:[%s4 + $0x8] sm:$0xff]
    %v1967 = vld [vmem:[%s4 + $0x10] sm:$0xff]
    %v1968 = vld [vmem:[%s4 + $0x18] sm:$0xff]
    %v1969 = vld [vmem:[%s4 + $0x20] sm:$0xff]
    %v1970 = vld [vmem:[%s4 + $0x28] sm:$0xff]
    %v1971 = vld [vmem:[%s4 + $0x30] sm:$0xff]
    %v1972 = vld [vmem:[%s4 + $0x38] sm:$0xff]
    %v1973 = vld [vmem:[%s4 + $0x40] sm:$0xff]
    %v1974 = vld [vmem:[%s4 + $0x48] sm:$0xff]
    %v1975 = vld [vmem:[%s4 + $0x50] sm:$0xff]
    %v1976 = vld [vmem:[%s4 + $0x58] sm:$0xff]
    %v1977 = vld [vmem:[%s4 + $0x60] sm:$0xff]
    %v1978 = vld [vmem:[%s4 + $0x68] sm:$0xff]
    %v1979 = vld [vmem:[%s4 + $0x70] sm:$0xff]
    %v1980 = vld [vmem:[%s4 + $0x78] sm:$0xff]
    %v1981 = vld [vmem:[%s4 + $0x80] sm:$0xff]
    %v1982 = vld [vmem:[%s4 + $0x88] sm:$0xff]
    %v1983 = vld [vmem:[%s4 + $0x90] sm:$0xff]
    %v1984 = vld [vmem:[%s4 + $0x98] sm:$0xff]
    %v1985 = vld [vmem:[%s4 + $0xa0] sm:$0xff]
    %v1986 = vld [vmem:[%s4 + $0xa8] sm:$0xff]
    %v1987 = vld [vmem:[%s4 + $0xb0] sm:$0xff]
    %v1988 = vld [vmem:[%s4 + $0xb8] sm:$0xff]
    %v1989 = vld [vmem:[%s4 + $0xc0] sm:$0xff]
    %v1990 = vld [vmem:[%s4 + $0xc8] sm:$0xff]
    %v1991 = vld [vmem:[%s4 + $0xd0] sm:$0xff]
    %v1992 = vld [vmem:[%s4 + $0xd8] sm:$0xff]
    %v1993 = vld [vmem:[%s4 + $0xe0] sm:$0xff]
    %v1994 = vld [vmem:[%s4 + $0xe8] sm:$0xff]
    %v1995 = vld [vmem:[%s4 + $0xf0] sm:$0xff]
    %v1996 = vld [vmem:[%s4 + $0xf8] sm:$0xff]
    %v2029 = vunpack.c.l.b16 %v1965
    %v2030 = vunpack.c.h.b16 %v1965
    %v2031 = vunpack.c.l.b16 %v1966
    %v2032 = vunpack.c.h.b16 %v1966
    %v2033 = vunpack.c.l.b16 %v1967
    %v2034 = vunpack.c.h.b16 %v1967
    %v2035 = vunpack.c.l.b16 %v1968
    %v2036 = vunpack.c.h.b16 %v1968
    %v2037 = vunpack.c.l.b16 %v1969
    %v2038 = vunpack.c.h.b16 %v1969
    %v2039 = vunpack.c.l.b16 %v1970
    %v2040 = vunpack.c.h.b16 %v1970
    %v2041 = vunpack.c.l.b16 %v1971
    %v2042 = vunpack.c.h.b16 %v1971
    %v2043 = vunpack.c.l.b16 %v1972
    %v2044 = vunpack.c.h.b16 %v1972
    %v2045 = vunpack.c.l.b16 %v1973
    %v2046 = vunpack.c.h.b16 %v1973
    %v2047 = vunpack.c.l.b16 %v1974
    %v2048 = vunpack.c.h.b16 %v1974
    %v2049 = vunpack.c.l.b16 %v1975
    %v2050 = vunpack.c.h.b16 %v1975
    %v2051 = vunpack.c.l.b16 %v1976
    %v2052 = vunpack.c.h.b16 %v1976
    %v2053 = vunpack.c.l.b16 %v1977
    %v2054 = vunpack.c.h.b16 %v1977
    %v2055 = vunpack.c.l.b16 %v1978
    %v2056 = vunpack.c.h.b16 %v1978
    %v2057 = vunpack.c.l.b16 %v1979
    %v2058 = vunpack.c.h.b16 %v1979
    %v2059 = vunpack.c.l.b16 %v1980
    %v2060 = vunpack.c.h.b16 %v1980
    %v2061 = vunpack.c.l.b16 %v1981
    %v2062 = vunpack.c.h.b16 %v1981
    %v2063 = vunpack.c.l.b16 %v1982
    %v2064 = vunpack.c.h.b16 %v1982
    %v2065 = vunpack.c.l.b16 %v1983
    %v2066 = vunpack.c.h.b16 %v1983
    %v2067 = vunpack.c.l.b16 %v1984
    %v2068 = vunpack.c.h.b16 %v1984
    %v2069 = vunpack.c.l.b16 %v1985
    %v2070 = vunpack.c.h.b16 %v1985
    %v2071 = vunpack.c.l.b16 %v1986
    %v2072 = vunpack.c.h.b16 %v1986
    %v2073 = vunpack.c.l.b16 %v1987
    %v2074 = vunpack.c.h.b16 %v1987
    %v2075 = vunpack.c.l.b16 %v1988
    %v2076 = vunpack.c.h.b16 %v1988
    %v2077 = vunpack.c.l.b16 %v1989
    %v2078 = vunpack.c.h.b16 %v1989
    %v2079 = vunpack.c.l.b16 %v1990
    %v2080 = vunpack.c.h.b16 %v1990
    %v2081 = vunpack.c.l.b16 %v1991
    %v2082 = vunpack.c.h.b16 %v1991
    %v2083 = vunpack.c.l.b16 %v1992
    %v2084 = vunpack.c.h.b16 %v1992
    %v2085 = vunpack.c.l.b16 %v1993
    %v2086 = vunpack.c.h.b16 %v1993
    %v2087 = vunpack.c.l.b16 %v1994
    %v2088 = vunpack.c.h.b16 %v1994
    %v2089 = vunpack.c.l.b16 %v1995
    %v2090 = vunpack.c.h.b16 %v1995
    %v2091 = vunpack.c.l.b16 %v1996
    %v2092 = vunpack.c.h.b16 %v1996
    %v2093 = vpack.c.b16 %v2031, %v2029
    %v2094 = vpack.c.b16 %v2032, %v2030
    %v2095 = vpack.c.b16 %v2035, %v2033
    %v2096 = vpack.c.b16 %v2036, %v2034
    %v2097 = vpack.c.b16 %v2039, %v2037
    %v2098 = vpack.c.b16 %v2040, %v2038
    %v2099 = vpack.c.b16 %v2043, %v2041
    %v2100 = vpack.c.b16 %v2044, %v2042
    %v2101 = vpack.c.b16 %v2047, %v2045
    %v2102 = vpack.c.b16 %v2048, %v2046
    %v2103 = vpack.c.b16 %v2051, %v2049
    %v2104 = vpack.c.b16 %v2052, %v2050
    %v2105 = vpack.c.b16 %v2055, %v2053
    %v2106 = vpack.c.b16 %v2056, %v2054
    %v2107 = vpack.c.b16 %v2059, %v2057
    %v2108 = vpack.c.b16 %v2060, %v2058
    %v2109 = vpack.c.b16 %v2063, %v2061
    %v2110 = vpack.c.b16 %v2064, %v2062
    %v2111 = vpack.c.b16 %v2067, %v2065
    %v2112 = vpack.c.b16 %v2068, %v2066
    %v2113 = vpack.c.b16 %v2071, %v2069
    %v2114 = vpack.c.b16 %v2072, %v2070
    %v2115 = vpack.c.b16 %v2075, %v2073
    %v2116 = vpack.c.b16 %v2076, %v2074
    %v2117 = vpack.c.b16 %v2079, %v2077
    %v2118 = vpack.c.b16 %v2080, %v2078
    %v2119 = vpack.c.b16 %v2083, %v2081
    %v2120 = vpack.c.b16 %v2084, %v2082
    %v2121 = vpack.c.b16 %v2087, %v2085
    %v2122 = vpack.c.b16 %v2088, %v2086
    %v2123 = vpack.c.b16 %v2091, %v2089
    %v2124 = vpack.c.b16 %v2092, %v2090
    %2157 = vmatpush.bf16.msra.mxu0 %v2107
    %2158 = vmatpush.bf16.msra.mxu0 %v2105
    %2159 = vmatpush.bf16.msra.mxu0 %v2103
    %2160 = vmatpush.bf16.msra.mxu0 %v2101
    %2161 = vmatpush.bf16.msra.mxu0 %v2099
    %2162 = vmatpush.bf16.msra.mxu0 %v2097
    %2163 = vmatpush.bf16.msra.mxu0 %v2095
    %2164 = vmatpush.bf16.msra.mxu0 %v2093
    %2165 = vmatmul.bf16.gmra.mxu0 %v1933
    %v2166 = vpop.f32.mrf.mxu0
    %v2167 = vadd.f32 0.0, %v2166
    %v2168 = vpop.f32.mrf.mxu0
    %v2169 = vadd.f32 0.0, %v2168
    %2170 = vmatmul.bf16.gmra.mxu0 %v1935
    %v2171 = vpop.f32.mrf.mxu0
    %v2172 = vadd.f32 0.0, %v2171
    %v2173 = vpop.f32.mrf.mxu0
    %v2174 = vadd.f32 0.0, %v2173
    %2175 = vmatmul.bf16.gmra.mxu0 %v1937
    %v2176 = vpop.f32.mrf.mxu0
    %v2177 = vadd.f32 0.0, %v2176
    %v2178 = vpop.f32.mrf.mxu0
    %v2179 = vadd.f32 0.0, %v2178
    %2180 = vmatmul.bf16.gmra.mxu0 %v1939
    %v2181 = vpop.f32.mrf.mxu0
    %v2182 = vadd.f32 0.0, %v2181
    %v2183 = vpop.f32.mrf.mxu0
    %v2184 = vadd.f32 0.0, %v2183
    %2185 = vmatmul.bf16.gmra.mxu0 %v1941
    %v2186 = vpop.f32.mrf.mxu0
    %v2187 = vadd.f32 0.0, %v2186
    %v2188 = vpop.f32.mrf.mxu0
    %v2189 = vadd.f32 0.0, %v2188
    %2190 = vmatmul.bf16.gmra.mxu0 %v1943
    %v2191 = vpop.f32.mrf.mxu0
    %v2192 = vadd.f32 0.0, %v2191
    %v2193 = vpop.f32.mrf.mxu0
    %v2194 = vadd.f32 0.0, %v2193
    %2195 = vmatmul.bf16.gmra.mxu0 %v1945
    %v2196 = vpop.f32.mrf.mxu0
    %v2197 = vadd.f32 0.0, %v2196
    %v2198 = vpop.f32.mrf.mxu0
    %v2199 = vadd.f32 0.0, %v2198
    %2200 = vmatmul.bf16.gmra.mxu0 %v1947
    %v2201 = vpop.f32.mrf.mxu0
    %v2202 = vadd.f32 0.0, %v2201
    %v2203 = vpop.f32.mrf.mxu0
    %v2204 = vadd.f32 0.0, %v2203
    %2205 = vmatmul.bf16.gmra.mxu0 %v1949
    %v2206 = vpop.f32.mrf.mxu0
    %v2207 = vadd.f32 0.0, %v2206
    %v2208 = vpop.f32.mrf.mxu0
    %v2209 = vadd.f32 0.0, %v2208
    %2210 = vmatmul.bf16.gmra.mxu0 %v1951
    %v2211 = vpop.f32.mrf.mxu0
    %v2212 = vadd.f32 0.0, %v2211
    %v2213 = vpop.f32.mrf.mxu0
    %v2214 = vadd.f32 0.0, %v2213
    %2215 = vmatmul.bf16.gmra.mxu0 %v1953
    %v2216 = vpop.f32.mrf.mxu0
    %v2217 = vadd.f32 0.0, %v2216
    %v2218 = vpop.f32.mrf.mxu0
    %v2219 = vadd.f32 0.0, %v2218
    %2220 = vmatmul.bf16.gmra.mxu0 %v1955
    %v2221 = vpop.f32.mrf.mxu0
    %v2222 = vadd.f32 0.0, %v2221
    %v2223 = vpop.f32.mrf.mxu0
    %v2224 = vadd.f32 0.0, %v2223
    %2225 = vmatmul.bf16.gmra.mxu0 %v1957
    %v2226 = vpop.f32.mrf.mxu0
    %v2227 = vadd.f32 0.0, %v2226
    %v2228 = vpop.f32.mrf.mxu0
    %v2229 = vadd.f32 0.0, %v2228
    %2230 = vmatmul.bf16.gmra.mxu0 %v1959
    %v2231 = vpop.f32.mrf.mxu0
    %v2232 = vadd.f32 0.0, %v2231
    %v2233 = vpop.f32.mrf.mxu0
    %v2234 = vadd.f32 0.0, %v2233
    %2235 = vmatmul.bf16.gmra.mxu0 %v1961
    %v2236 = vpop.f32.mrf.mxu0
    %v2237 = vadd.f32 0.0, %v2236
    %v2238 = vpop.f32.mrf.mxu0
    %v2239 = vadd.f32 0.0, %v2238
    %2240 = vmatmul.bf16.gmra.mxu0 %v1963
    %v2241 = vpop.f32.mrf.mxu0
    %v2242 = vadd.f32 0.0, %v2241
    %v2243 = vpop.f32.mrf.mxu0
    %v2244 = vadd.f32 0.0, %v2243
    %2245 = vdwg.mxu0
    %2246 = vmatpush.bf16.msra.mxu0 %v2123
    %2247 = vmatpush.bf16.msra.mxu0 %v2121
    %2248 = vmatpush.bf16.msra.mxu0 %v2119
    %2249 = vmatpush.bf16.msra.mxu0 %v2117
    %2250 = vmatpush.bf16.msra.mxu0 %v2115
    %2251 = vmatpush.bf16.msra.mxu0 %v2113
    %2252 = vmatpush.bf16.msra.mxu0 %v2111
    %2253 = vmatpush.bf16.msra.mxu0 %v2109
    %2254 = vmatmul.bf16.gmra.mxu0 %v1934
    %v2255 = vpop.f32.mrf.mxu0
    %v2256 = vadd.f32 %v2167, %v2255
    %v2257 = vpop.f32.mrf.mxu0
    %v2258 = vadd.f32 %v2169, %v2257
    %2259 = vmatmul.bf16.gmra.mxu0 %v1936
    %v2260 = vpop.f32.mrf.mxu0
    %v2261 = vadd.f32 %v2172, %v2260
    %v2262 = vpop.f32.mrf.mxu0
    %v2263 = vadd.f32 %v2174, %v2262
    %2264 = vmatmul.bf16.gmra.mxu0 %v1938
    %v2265 = vpop.f32.mrf.mxu0
    %v2266 = vadd.f32 %v2177, %v2265
    %v2267 = vpop.f32.mrf.mxu0
    %v2268 = vadd.f32 %v2179, %v2267
    %2269 = vmatmul.bf16.gmra.mxu0 %v1940
    %v2270 = vpop.f32.mrf.mxu0
    %v2271 = vadd.f32 %v2182, %v2270
    %v2272 = vpop.f32.mrf.mxu0
    %v2273 = vadd.f32 %v2184, %v2272
    %2274 = vmatmul.bf16.gmra.mxu0 %v1942
    %v2275 = vpop.f32.mrf.mxu0
    %v2276 = vadd.f32 %v2187, %v2275
    %v2277 = vpop.f32.mrf.mxu0
    %v2278 = vadd.f32 %v2189, %v2277
    %2279 = vmatmul.bf16.gmra.mxu0 %v1944
    %v2280 = vpop.f32.mrf.mxu0
    %v2281 = vadd.f32 %v2192, %v2280
    %v2282 = vpop.f32.mrf.mxu0
    %v2283 = vadd.f32 %v2194, %v2282
    %2284 = vmatmul.bf16.gmra.mxu0 %v1946
    %v2285 = vpop.f32.mrf.mxu0
    %v2286 = vadd.f32 %v2197, %v2285
    %v2287 = vpop.f32.mrf.mxu0
    %v2288 = vadd.f32 %v2199, %v2287
    %2289 = vmatmul.bf16.gmra.mxu0 %v1948
    %v2290 = vpop.f32.mrf.mxu0
    %v2291 = vadd.f32 %v2202, %v2290
    %v2292 = vpop.f32.mrf.mxu0
    %v2293 = vadd.f32 %v2204, %v2292
    %2294 = vmatmul.bf16.gmra.mxu0 %v1950
    %v2295 = vpop.f32.mrf.mxu0
    %v2296 = vadd.f32 %v2207, %v2295
    %v2297 = vpop.f32.mrf.mxu0
    %v2298 = vadd.f32 %v2209, %v2297
    %2299 = vmatmul.bf16.gmra.mxu0 %v1952
    %v2300 = vpop.f32.mrf.mxu0
    %v2301 = vadd.f32 %v2212, %v2300
    %v2302 = vpop.f32.mrf.mxu0
    %v2303 = vadd.f32 %v2214, %v2302
    %2304 = vmatmul.bf16.gmra.mxu0 %v1954
    %v2305 = vpop.f32.mrf.mxu0
    %v2306 = vadd.f32 %v2217, %v2305
    %v2307 = vpop.f32.mrf.mxu0
    %v2308 = vadd.f32 %v2219, %v2307
    %2309 = vmatmul.bf16.gmra.mxu0 %v1956
    %v2310 = vpop.f32.mrf.mxu0
    %v2311 = vadd.f32 %v2222, %v2310
    %v2312 = vpop.f32.mrf.mxu0
    %v2313 = vadd.f32 %v2224, %v2312
    %2314 = vmatmul.bf16.gmra.mxu0 %v1958
    %v2315 = vpop.f32.mrf.mxu0
    %v2316 = vadd.f32 %v2227, %v2315
    %v2317 = vpop.f32.mrf.mxu0
    %v2318 = vadd.f32 %v2229, %v2317
    %2319 = vmatmul.bf16.gmra.mxu0 %v1960
    %v2320 = vpop.f32.mrf.mxu0
    %v2321 = vadd.f32 %v2232, %v2320
    %v2322 = vpop.f32.mrf.mxu0
    %v2323 = vadd.f32 %v2234, %v2322
    %2324 = vmatmul.bf16.gmra.mxu0 %v1962
    %v2325 = vpop.f32.mrf.mxu0
    %v2326 = vadd.f32 %v2237, %v2325
    %v2327 = vpop.f32.mrf.mxu0
    %v2328 = vadd.f32 %v2239, %v2327
    %2329 = vmatmul.bf16.gmra.mxu0 %v1964
    %v2330 = vpop.f32.mrf.mxu0
    %v2331 = vadd.f32 %v2242, %v2330
    %v2332 = vpop.f32.mrf.mxu0
    %v2333 = vadd.f32 %v2244, %v2332
    %2334 = vdwg.mxu0
    %2335 = vmatpush.bf16.msra.mxu0 %v2108
    %2336 = vmatpush.bf16.msra.mxu0 %v2106
    %2337 = vmatpush.bf16.msra.mxu0 %v2104
    %2338 = vmatpush.bf16.msra.mxu0 %v2102
    %2339 = vmatpush.bf16.msra.mxu0 %v2100
    %2340 = vmatpush.bf16.msra.mxu0 %v2098
    %2341 = vmatpush.bf16.msra.mxu0 %v2096
    %2342 = vmatpush.bf16.msra.mxu0 %v2094
    %2343 = vmatmul.bf16.gmra.mxu0 %v1933
    %v2344 = vpop.f32.mrf.mxu0
    %v2345 = vadd.f32 0.0, %v2344
    %v2346 = vpop.f32.mrf.mxu0
    %v2347 = vadd.f32 0.0, %v2346
    %2348 = vmatmul.bf16.gmra.mxu0 %v1935
    %v2349 = vpop.f32.mrf.mxu0
    %v2350 = vadd.f32 0.0, %v2349
    %v2351 = vpop.f32.mrf.mxu0
    %v2352 = vadd.f32 0.0, %v2351
    %2353 = vmatmul.bf16.gmra.mxu0 %v1937
    %v2354 = vpop.f32.mrf.mxu0
    %v2355 = vadd.f32 0.0, %v2354
    %v2356 = vpop.f32.mrf.mxu0
    %v2357 = vadd.f32 0.0, %v2356
    %2358 = vmatmul.bf16.gmra.mxu0 %v1939
    %v2359 = vpop.f32.mrf.mxu0
    %v2360 = vadd.f32 0.0, %v2359
    %v2361 = vpop.f32.mrf.mxu0
    %v2362 = vadd.f32 0.0, %v2361
    %2363 = vmatmul.bf16.gmra.mxu0 %v1941
    %v2364 = vpop.f32.mrf.mxu0
    %v2365 = vadd.f32 0.0, %v2364
    %v2366 = vpop.f32.mrf.mxu0
    %v2367 = vadd.f32 0.0, %v2366
    %2368 = vmatmul.bf16.gmra.mxu0 %v1943
    %v2369 = vpop.f32.mrf.mxu0
    %v2370 = vadd.f32 0.0, %v2369
    %v2371 = vpop.f32.mrf.mxu0
    %v2372 = vadd.f32 0.0, %v2371
    %2373 = vmatmul.bf16.gmra.mxu0 %v1945
    %v2374 = vpop.f32.mrf.mxu0
    %v2375 = vadd.f32 0.0, %v2374
    %v2376 = vpop.f32.mrf.mxu0
    %v2377 = vadd.f32 0.0, %v2376
    %2378 = vmatmul.bf16.gmra.mxu0 %v1947
    %v2379 = vpop.f32.mrf.mxu0
    %v2380 = vadd.f32 0.0, %v2379
    %v2381 = vpop.f32.mrf.mxu0
    %v2382 = vadd.f32 0.0, %v2381
    %2383 = vmatmul.bf16.gmra.mxu0 %v1949
    %v2384 = vpop.f32.mrf.mxu0
    %v2385 = vadd.f32 0.0, %v2384
    %v2386 = vpop.f32.mrf.mxu0
    %v2387 = vadd.f32 0.0, %v2386
    %2388 = vmatmul.bf16.gmra.mxu0 %v1951
    %v2389 = vpop.f32.mrf.mxu0
    %v2390 = vadd.f32 0.0, %v2389
    %v2391 = vpop.f32.mrf.mxu0
    %v2392 = vadd.f32 0.0, %v2391
    %2393 = vmatmul.bf16.gmra.mxu0 %v1953
    %v2394 = vpop.f32.mrf.mxu0
    %v2395 = vadd.f32 0.0, %v2394
    %v2396 = vpop.f32.mrf.mxu0
    %v2397 = vadd.f32 0.0, %v2396
    %2398 = vmatmul.bf16.gmra.mxu0 %v1955
    %v2399 = vpop.f32.mrf.mxu0
    %v2400 = vadd.f32 0.0, %v2399
    %v2401 = vpop.f32.mrf.mxu0
    %v2402 = vadd.f32 0.0, %v2401
    %2403 = vmatmul.bf16.gmra.mxu0 %v1957
    %v2404 = vpop.f32.mrf.mxu0
    %v2405 = vadd.f32 0.0, %v2404
    %v2406 = vpop.f32.mrf.mxu0
    %v2407 = vadd.f32 0.0, %v2406
    %2408 = vmatmul.bf16.gmra.mxu0 %v1959
    %v2409 = vpop.f32.mrf.mxu0
    %v2410 = vadd.f32 0.0, %v2409
    %v2411 = vpop.f32.mrf.mxu0
    %v2412 = vadd.f32 0.0, %v2411
    %2413 = vmatmul.bf16.gmra.mxu0 %v1961
    %v2414 = vpop.f32.mrf.mxu0
    %v2415 = vadd.f32 0.0, %v2414
    %v2416 = vpop.f32.mrf.mxu0
    %v2417 = vadd.f32 0.0, %v2416
    %2418 = vmatmul.bf16.gmra.mxu0 %v1963
    %v2419 = vpop.f32.mrf.mxu0
    %v2420 = vadd.f32 0.0, %v2419
    %v2421 = vpop.f32.mrf.mxu0
    %v2422 = vadd.f32 0.0, %v2421
    %2423 = vdwg.mxu0
    %2424 = vmatpush.bf16.msra.mxu0 %v2124
    %2425 = vmatpush.bf16.msra.mxu0 %v2122
    %2426 = vmatpush.bf16.msra.mxu0 %v2120
    %2427 = vmatpush.bf16.msra.mxu0 %v2118
    %2428 = vmatpush.bf16.msra.mxu0 %v2116
    %2429 = vmatpush.bf16.msra.mxu0 %v2114
    %2430 = vmatpush.bf16.msra.mxu0 %v2112
    %2431 = vmatpush.bf16.msra.mxu0 %v2110
    %2432 = vmatmul.bf16.gmra.mxu0 %v1934
    %v2433 = vpop.f32.mrf.mxu0
    %v2434 = vadd.f32 %v2345, %v2433
    %v2435 = vpop.f32.mrf.mxu0
    %v2436 = vadd.f32 %v2347, %v2435
    %2437 = vmatmul.bf16.gmra.mxu0 %v1936
    %v2438 = vpop.f32.mrf.mxu0
    %v2439 = vadd.f32 %v2350, %v2438
    %v2440 = vpop.f32.mrf.mxu0
    %v2441 = vadd.f32 %v2352, %v2440
    %2442 = vmatmul.bf16.gmra.mxu0 %v1938
    %v2443 = vpop.f32.mrf.mxu0
    %v2444 = vadd.f32 %v2355, %v2443
    %v2445 = vpop.f32.mrf.mxu0
    %v2446 = vadd.f32 %v2357, %v2445
    %2447 = vmatmul.bf16.gmra.mxu0 %v1940
    %v2448 = vpop.f32.mrf.mxu0
    %v2449 = vadd.f32 %v2360, %v2448
    %v2450 = vpop.f32.mrf.mxu0
    %v2451 = vadd.f32 %v2362, %v2450
    %2452 = vmatmul.bf16.gmra.mxu0 %v1942
    %v2453 = vpop.f32.mrf.mxu0
    %v2454 = vadd.f32 %v2365, %v2453
    %v2455 = vpop.f32.mrf.mxu0
    %v2456 = vadd.f32 %v2367, %v2455
    %2457 = vmatmul.bf16.gmra.mxu0 %v1944
    %v2458 = vpop.f32.mrf.mxu0
    %v2459 = vadd.f32 %v2370, %v2458
    %v2460 = vpop.f32.mrf.mxu0
    %v2461 = vadd.f32 %v2372, %v2460
    %2462 = vmatmul.bf16.gmra.mxu0 %v1946
    %v2463 = vpop.f32.mrf.mxu0
    %v2464 = vadd.f32 %v2375, %v2463
    %v2465 = vpop.f32.mrf.mxu0
    %v2466 = vadd.f32 %v2377, %v2465
    %2467 = vmatmul.bf16.gmra.mxu0 %v1948
    %v2468 = vpop.f32.mrf.mxu0
    %v2469 = vadd.f32 %v2380, %v2468
    %v2470 = vpop.f32.mrf.mxu0
    %v2471 = vadd.f32 %v2382, %v2470
    %2472 = vmatmul.bf16.gmra.mxu0 %v1950
    %v2473 = vpop.f32.mrf.mxu0
    %v2474 = vadd.f32 %v2385, %v2473
    %v2475 = vpop.f32.mrf.mxu0
    %v2476 = vadd.f32 %v2387, %v2475
    %2477 = vmatmul.bf16.gmra.mxu0 %v1952
    %v2478 = vpop.f32.mrf.mxu0
    %v2479 = vadd.f32 %v2390, %v2478
    %v2480 = vpop.f32.mrf.mxu0
    %v2481 = vadd.f32 %v2392, %v2480
    %2482 = vmatmul.bf16.gmra.mxu0 %v1954
    %v2483 = vpop.f32.mrf.mxu0
    %v2484 = vadd.f32 %v2395, %v2483
    %v2485 = vpop.f32.mrf.mxu0
    %v2486 = vadd.f32 %v2397, %v2485
    %2487 = vmatmul.bf16.gmra.mxu0 %v1956
    %v2488 = vpop.f32.mrf.mxu0
    %v2489 = vadd.f32 %v2400, %v2488
    %v2490 = vpop.f32.mrf.mxu0
    %v2491 = vadd.f32 %v2402, %v2490
    %2492 = vmatmul.bf16.gmra.mxu0 %v1958
    %v2493 = vpop.f32.mrf.mxu0
    %v2494 = vadd.f32 %v2405, %v2493
    %v2495 = vpop.f32.mrf.mxu0
    %v2496 = vadd.f32 %v2407, %v2495
    %2497 = vmatmul.bf16.gmra.mxu0 %v1960
    %v2498 = vpop.f32.mrf.mxu0
    %v2499 = vadd.f32 %v2410, %v2498
    %v2500 = vpop.f32.mrf.mxu0
    %v2501 = vadd.f32 %v2412, %v2500
    %2502 = vmatmul.bf16.gmra.mxu0 %v1962
    %v2503 = vpop.f32.mrf.mxu0
    %v2504 = vadd.f32 %v2415, %v2503
    %v2505 = vpop.f32.mrf.mxu0
    %v2506 = vadd.f32 %v2417, %v2505
    %2507 = vmatmul.bf16.gmra.mxu0 %v1964
    %v2508 = vpop.f32.mrf.mxu0
    %v2509 = vadd.f32 %v2420, %v2508
    %v2510 = vpop.f32.mrf.mxu0
    %v2511 = vadd.f32 %v2422, %v2510
    %2512 = vdwg.mxu0
    %v2513 = vpack.c.bf16 %v2434, %v2256
    %v2514 = vpack.c.bf16 %v2436, %v2258
    %v2515 = vpack.c.bf16 %v2439, %v2261
    %v2516 = vpack.c.bf16 %v2441, %v2263
    %v2517 = vpack.c.bf16 %v2444, %v2266
    %v2518 = vpack.c.bf16 %v2446, %v2268
    %v2519 = vpack.c.bf16 %v2449, %v2271
    %v2520 = vpack.c.bf16 %v2451, %v2273
    %v2521 = vpack.c.bf16 %v2454, %v2276
    %v2522 = vpack.c.bf16 %v2456, %v2278
    %v2523 = vpack.c.bf16 %v2459, %v2281
    %v2524 = vpack.c.bf16 %v2461, %v2283
    %v2525 = vpack.c.bf16 %v2464, %v2286
    %v2526 = vpack.c.bf16 %v2466, %v2288
    %v2527 = vpack.c.bf16 %v2469, %v2291
    %v2528 = vpack.c.bf16 %v2471, %v2293
    %v2529 = vpack.c.bf16 %v2474, %v2296
    %v2530 = vpack.c.bf16 %v2476, %v2298
    %v2531 = vpack.c.bf16 %v2479, %v2301
    %v2532 = vpack.c.bf16 %v2481, %v2303
    %v2533 = vpack.c.bf16 %v2484, %v2306
    %v2534 = vpack.c.bf16 %v2486, %v2308
    %v2535 = vpack.c.bf16 %v2489, %v2311
    %v2536 = vpack.c.bf16 %v2491, %v2313
    %v2537 = vpack.c.bf16 %v2494, %v2316
    %v2538 = vpack.c.bf16 %v2496, %v2318
    %v2539 = vpack.c.bf16 %v2499, %v2321
    %v2540 = vpack.c.bf16 %v2501, %v2323
    %v2541 = vpack.c.bf16 %v2504, %v2326
    %v2542 = vpack.c.bf16 %v2506, %v2328
    %v2543 = vpack.c.bf16 %v2509, %v2331
    %v2544 = vpack.c.bf16 %v2511, %v2333
    %2545 = vst [vmem:[#allocation5] sm:$0xff] %v2513
    %2546 = vst [vmem:[#allocation5 + $0x8] sm:$0xff] %v2514
    %2547 = vst [vmem:[#allocation5 + $0x10] sm:$0xff] %v2515
    %2548 = vst [vmem:[#allocation5 + $0x18] sm:$0xff] %v2516
    %2549 = vst [vmem:[#allocation5 + $0x20] sm:$0xff] %v2517
    %2550 = vst [vmem:[#allocation5 + $0x28] sm:$0xff] %v2518
    %2551 = vst [vmem:[#allocation5 + $0x30] sm:$0xff] %v2519
    %2552 = vst [vmem:[#allocation5 + $0x38] sm:$0xff] %v2520
    %2553 = vst [vmem:[#allocation5 + $0x40] sm:$0xff] %v2521
    %2554 = vst [vmem:[#allocation5 + $0x48] sm:$0xff] %v2522
    %2555 = vst [vmem:[#allocation5 + $0x50] sm:$0xff] %v2523
    %2556 = vst [vmem:[#allocation5 + $0x58] sm:$0xff] %v2524
    %2557 = vst [vmem:[#allocation5 + $0x60] sm:$0xff] %v2525
    %2558 = vst [vmem:[#allocation5 + $0x68] sm:$0xff] %v2526
    %2559 = vst [vmem:[#allocation5 + $0x70] sm:$0xff] %v2527
    %2560 = vst [vmem:[#allocation5 + $0x78] sm:$0xff] %v2528
    %2561 = vst [vmem:[#allocation5 + $0x80] sm:$0xff] %v2529
    %2562 = vst [vmem:[#allocation5 + $0x88] sm:$0xff] %v2530
    %2563 = vst [vmem:[#allocation5 + $0x90] sm:$0xff] %v2531
    %2564 = vst [vmem:[#allocation5 + $0x98] sm:$0xff] %v2532
    %2565 = vst [vmem:[#allocation5 + $0xa0] sm:$0xff] %v2533
    %2566 = vst [vmem:[#allocation5 + $0xa8] sm:$0xff] %v2534
    %2567 = vst [vmem:[#allocation5 + $0xb0] sm:$0xff] %v2535
    %2568 = vst [vmem:[#allocation5 + $0xb8] sm:$0xff] %v2536
    %2569 = vst [vmem:[#allocation5 + $0xc0] sm:$0xff] %v2537
    %2570 = vst [vmem:[#allocation5 + $0xc8] sm:$0xff] %v2538
    %2571 = vst [vmem:[#allocation5 + $0xd0] sm:$0xff] %v2539
    %2572 = vst [vmem:[#allocation5 + $0xd8] sm:$0xff] %v2540
    %2573 = vst [vmem:[#allocation5 + $0xe0] sm:$0xff] %v2541
    %2574 = vst [vmem:[#allocation5 + $0xe8] sm:$0xff] %v2542
    %2575 = vst [vmem:[#allocation5 + $0xf0] sm:$0xff] %v2543
    %2576 = vst [vmem:[#allocation5 + $0xf8] sm:$0xff] %v2544
    // Predicated region
    $region26: #{tpu_custom_call.1} parent=1 // pred_check
      _
    $region27: #{tpu_custom_call.1} parent=1 // pred_check_branch
      %2578 = sbr.rel (0) target = $region29
    $region28: #{tpu_custom_call.1} parent=1 // pred_region
      %2580 = vsyncadd [#allocation4], 0
      %s2581 = sshll.u32 [#allocation5], 4
      %s2582 = int_to_ptr.vmem [resolvable:$true] %s2581
      %s2583 = sshll.u32 %s5, 4
      %s2584 = int_to_ptr.hbm [resolvable:$true] %s2583
      %2589 = dma.vmem_to_hbm [thread:$0]  %s2582, 4096, %s2584, [#allocation4], 128, 128, 8
    $region29: #{tpu_custom_call.1} parent=1 // pred_fallthru
      _
    // Predicated region
    $region30: #{tpu_custom_call.1} parent=1 // pred_check
      _
    $region31: #{tpu_custom_call.1} parent=1 // pred_check_branch
      %2591 = sbr.rel (0) target = $region33
    $region32: #{tpu_custom_call.1} parent=1 // pred_region
      %2593 = dma.done [#allocation4], 4096
    $region33: #{tpu_custom_call.1} parent=1 // pred_fallthru
      _
    %2594 = vsyncpa [#allocation3], 1
    %2595 = vsyncpa [#allocation4], 1

</llo_original>
